<compile_context>
chip_gen: v6e
topology: v6e:2x2x1
jax: 0.10.0
libtpu: 0.0.40
codegen_flags: <defaults>
</compile_context>

<pallas_src>
import jax
import jax.numpy as jnp
from jax.experimental import pallas as pl
from jax.experimental.pallas import tpu as pltpu

LANE = 128
SUBLANE_BF16 = 16  # sublane packing of a bf16 vreg: block 2nd-minor multiple


def _round_up(n, m):
    return (n + m - 1) // m * m


def mlp_kernel(x_ref, w1_ref, b1_ref, w2_ref, b2_ref, w3_ref, b3_ref, o_ref):
    # x / weights arrive as bf16 (native MXU path on v5e/v6e/v7x); accumulate
    # in f32.  Bias add / ReLU stay f32 (v5e has no bf16 VPU path anyway).
    x = x_ref[...]
    h1 = jnp.dot(x, w1_ref[...], preferred_element_type=jnp.float32) + b1_ref[...]
    h1 = jnp.maximum(h1, 0.0)
    h2 = jnp.dot(h1.astype(jnp.bfloat16), w2_ref[...],
                 preferred_element_type=jnp.float32) + b2_ref[...]
    h2 = jnp.maximum(h2, 0.0)
    out = jnp.dot(h2.astype(jnp.bfloat16), w3_ref[...],
                  preferred_element_type=jnp.float32) + b3_ref[...]
    # Lane-dense (tb, 128) store; the wrapper slices back to n_actions.
    o_ref[...] = out.astype(o_ref.dtype)


def prepare_params(params):
    """Convert f32 (in, out) params into the kernel layout:
    bf16 weights (halves HBM->VMEM weight DMA), f32 biases, and a last layer
    zero-padded along the output dim to a full 128-lane width."""
    w3 = params["w3"]
    b3 = params["b3"]
    n_actions = w3.shape[1]
    n_pad = _round_up(n_actions, LANE)
    w3p = jnp.zeros((w3.shape[0], n_pad), jnp.float32).at[:, :n_actions].set(w3)
    b3p = jnp.zeros((1, n_pad), jnp.float32).at[:, :n_actions].set(b3)
    return dict(
        w1=params["w1"].astype(jnp.bfloat16),
        b1=params["b1"].astype(jnp.float32),
        w2=params["w2"].astype(jnp.bfloat16),
        b2=params["b2"].astype(jnp.float32),
        w3=w3p.astype(jnp.bfloat16),
        b3=b3p,
    )


def _pick_tile(B, tb_req):
    """Batch tile size: multiple of 16 (bf16 sublanes), capped at the request,
    and guaranteeing >= 2 balanced tiles whenever the batch is large enough so
    the "parallel" grid axis can shard across both v7x TensorCores."""
    if B <= SUBLANE_BF16:
        return B  # single block covering the whole (tiny) batch
    tb_req = max(SUBLANE_BF16, _round_up(tb_req, SUBLANE_BF16))
    n_tiles = max(pl.cdiv(B, tb_req), 2)
    return _round_up(pl.cdiv(B, n_tiles), SUBLANE_BF16)


def net_forward(x, packed, n_actions, *, tb=256, out_dtype=jnp.float32):
    """x: (B, obs_size) float32 or bfloat16. packed: output of prepare_params."""
    w1, b1 = packed["w1"], packed["b1"]
    w2, b2 = packed["w2"], packed["b2"]
    w3, b3 = packed["w3"], packed["b3"]
    B, obs = x.shape
    h1 = w1.shape[1]
    h2 = w2.shape[1]
    n_pad = w3.shape[1]

    # bf16 activations into the kernel: half the x DMA bytes, no in-kernel cast.
    if x.dtype != jnp.bfloat16:
        x = x.astype(jnp.bfloat16)

    tb_eff = _pick_tile(B, tb)
    grid = (pl.cdiv(B, tb_eff),)  # ragged last tile handled by masked writeback

    out_padded = pl.pallas_call(
        mlp_kernel,
        out_shape=jax.ShapeDtypeStruct((B, n_pad), out_dtype),
        grid_spec=pltpu.PrefetchScalarGridSpec(
            num_scalar_prefetch=0,
            grid=grid,
            in_specs=[
                pl.BlockSpec((tb_eff, obs), lambda i: (i, 0)),   # x tile per step
                pl.BlockSpec((obs, h1), lambda i: (0, 0)),       # w1 (VMEM-resident)
                pl.BlockSpec((1, h1), lambda i: (0, 0)),         # b1
                pl.BlockSpec((h1, h2), lambda i: (0, 0)),        # w2
                pl.BlockSpec((1, h2), lambda i: (0, 0)),         # b2
                pl.BlockSpec((h2, n_pad), lambda i: (0, 0)),     # w3 (lane-padded)
                pl.BlockSpec((1, n_pad), lambda i: (0, 0)),      # b3 (lane-padded)
            ],
            out_specs=pl.BlockSpec((tb_eff, n_pad), lambda i: (i, 0)),
        ),
        compiler_params=pltpu.CompilerParams(
            dimension_semantics=("parallel",),
        ),
    )(x, w1, b1, w2, b2, w3, b3)
    # Only the lane-padded-columns slice remains outside the kernel; fusing the
    # downstream consumer (softmax/argmax) into the epilogue would remove it.
    return out_padded[:, :n_actions]


def init_params(key, obs_size, n_actions):
    """Deterministic synthetic params matching the PyTorch module's shapes
    (stored transposed: (in, out)), float32 like torch defaults."""
    k1, k2, k3, k4, k5, k6 = jax.random.split(key, 6)

    def lin(kw, kb, fan_in, fan_out):
        bound = 1.0 / jnp.sqrt(fan_in)
        w = jax.random.uniform(kw, (fan_in, fan_out), jnp.float32, -bound, bound)
        b = jax.random.uniform(kb, (1, fan_out), jnp.float32, -bound, bound)
        return w, b

    w1, b1 = lin(k1, k2, obs_size, 1024)
    w2, b2 = lin(k3, k4, 1024, 256)
    w3, b3 = lin(k5, k6, 256, n_actions)
    return dict(w1=w1, b1=b1, w2=w2, b2=b2, w3=w3, b3=b3)


def net_ref_bf16(x, p):
    """Pure-JAX reference with the same bf16-input / f32-accumulate recipe."""
    bf = jnp.bfloat16
    h1 = jnp.maximum(
        jnp.dot(x.astype(bf), p["w1"].astype(bf),
                preferred_element_type=jnp.float32) + p["b1"], 0.0)
    h2 = jnp.maximum(
        jnp.dot(h1.astype(bf), p["w2"].astype(bf),
                preferred_element_type=jnp.float32) + p["b2"], 0.0)
    return jnp.dot(h2.astype(bf), p["w3"].astype(bf),
                   preferred_element_type=jnp.float32) + p["b3"]


def net_ref_f32(x, p):
    h1 = jnp.maximum(x @ p["w1"] + p["b1"], 0.0)
    h2 = jnp.maximum(h1 @ p["w2"] + p["b2"], 0.0)
    return h2 @ p["w3"] + p["b3"]


if __name__ == "__main__":
    key = jax.random.PRNGKey(0)
    kx, kx2, kp = jax.random.split(key, 3)

    batch = 200        # not a tile multiple: exercises the balanced 2x112 split
    obs_size = 128     # flattened Pong observation feature vector
    n_actions = 6      # Pong action space

    x = jax.random.normal(kx, (batch, obs_size), dtype=jnp.float32)
    params = init_params(kp, obs_size, n_actions)
    packed = prepare_params(params)

    out = jax.block_until_ready(net_forward(x, packed, n_actions, tb=256))
    assert out.shape == (batch, n_actions)

    # Check against a pure-JAX reference using the same bf16/f32-acc recipe.
    ref = jax.block_until_ready(net_ref_bf16(x, params))
    assert jnp.allclose(out, ref, atol=2e-3, rtol=2e-3), float(
        jnp.max(jnp.abs(out - ref)))
    # Loose check against the full-f32 PyTorch-equivalent math.
    ref32 = jax.block_until_ready(net_ref_f32(x, params))
    assert jnp.allclose(out, ref32, atol=5e-2, rtol=5e-2), float(
        jnp.max(jnp.abs(out - ref32)))

    # Small ragged batch: two 16-row tiles over 24 rows (masked OOB rows).
    x_small = jax.random.normal(kx2, (24, obs_size), dtype=jnp.float32)
    out_s = jax.block_until_ready(net_forward(x_small, packed, n_actions))
    ref_s = jax.block_until_ready(net_ref_bf16(x_small, params))
    assert out_s.shape == (24, n_actions)
    assert jnp.allclose(out_s, ref_s, atol=2e-3, rtol=2e-3), float(
        jnp.max(jnp.abs(out_s - ref_s)))

    print("KERNEL_OK")
</pallas_src>

<mosaic_0001>
module attributes {stable_mosaic.version = 11 : i64} {
  func.func @mlp_kernel(%arg0: i32, %arg1: memref<112x128xbf16, #tpu.memory_space<vmem>>, %arg2: memref<128x1024xbf16, #tpu.memory_space<vmem>>, %arg3: memref<1x1024xf32, #tpu.memory_space<vmem>>, %arg4: memref<1024x256xbf16, #tpu.memory_space<vmem>>, %arg5: memref<1x256xf32, #tpu.memory_space<vmem>>, %arg6: memref<256x128xbf16, #tpu.memory_space<vmem>>, %arg7: memref<1x128xf32, #tpu.memory_space<vmem>>, %arg8: memref<112x128xf32, #tpu.memory_space<vmem>>) attributes {dimension_semantics = [#tpu.dimension_semantics<parallel>], iteration_bounds = array<i64: 2>, scalar_prefetch = 0 : i64, scratch_operands = 0 : i64, tpu.core_type = #tpu.core_type<tc>, window_params = [{transform_indices = @transform_0, window_bounds = array<i64: 112, 128>}, {pipeline_mode = #tpu.pipeline_mode<synchronous>, transform_indices = @transform_1, window_bounds = array<i64: 128, 1024>}, {pipeline_mode = #tpu.pipeline_mode<synchronous>, transform_indices = @transform_2, window_bounds = array<i64: 1, 1024>}, {pipeline_mode = #tpu.pipeline_mode<synchronous>, transform_indices = @transform_3, window_bounds = array<i64: 1024, 256>}, {pipeline_mode = #tpu.pipeline_mode<synchronous>, transform_indices = @transform_4, window_bounds = array<i64: 1, 256>}, {pipeline_mode = #tpu.pipeline_mode<synchronous>, transform_indices = @transform_5, window_bounds = array<i64: 256, 128>}, {pipeline_mode = #tpu.pipeline_mode<synchronous>, transform_indices = @transform_6, window_bounds = array<i64: 1, 128>}, {transform_indices = @transform_7, window_bounds = array<i64: 112, 128>}]} {
    %c0 = arith.constant 0 : index
    %c0_0 = arith.constant 0 : index
    %0 = vector.load %arg1[%c0, %c0_0] : memref<112x128xbf16, #tpu.memory_space<vmem>>, vector<112x128xbf16>
    %c0_1 = arith.constant 0 : index
    %c0_2 = arith.constant 0 : index
    %1 = vector.load %arg2[%c0_1, %c0_2] : memref<128x1024xbf16, #tpu.memory_space<vmem>>, vector<128x1024xbf16>
    %cst = arith.constant dense<0.000000e+00> : vector<112x1024xf32>
    %2 = tpu.matmul %0, %1, %cst {dimension_numbers = #tpu.dot_dimension_numbers<[1], [0], [0], [1], [0, 0, 1, 1], [], []>} : vector<112x128xbf16>, vector<128x1024xbf16>, vector<112x1024xf32> -> vector<112x1024xf32>
    %c0_3 = arith.constant 0 : index
    %c0_4 = arith.constant 0 : index
    %3 = vector.load %arg3[%c0_3, %c0_4] : memref<1x1024xf32, #tpu.memory_space<vmem>>, vector<1x1024xf32>
    %4 = vector.broadcast %3 : vector<1x1024xf32> to vector<112x1024xf32>
    %5 = arith.addf %2, %4 : vector<112x1024xf32>
    %cst_5 = arith.constant 0.000000e+00 : f32
    %6 = vector.broadcast %cst_5 : f32 to vector<112x1024xf32>
    %7 = arith.maximumf %5, %6 : vector<112x1024xf32>
    %8 = arith.truncf %7 : vector<112x1024xf32> to vector<112x1024xbf16>
    %c0_6 = arith.constant 0 : index
    %c0_7 = arith.constant 0 : index
    %9 = vector.load %arg4[%c0_6, %c0_7] : memref<1024x256xbf16, #tpu.memory_space<vmem>>, vector<1024x256xbf16>
    %cst_8 = arith.constant dense<0.000000e+00> : vector<112x256xf32>
    %10 = tpu.matmul %8, %9, %cst_8 {dimension_numbers = #tpu.dot_dimension_numbers<[1], [0], [0], [1], [0, 0, 1, 1], [], []>} : vector<112x1024xbf16>, vector<1024x256xbf16>, vector<112x256xf32> -> vector<112x256xf32>
    %c0_9 = arith.constant 0 : index
    %c0_10 = arith.constant 0 : index
    %11 = vector.load %arg5[%c0_9, %c0_10] : memref<1x256xf32, #tpu.memory_space<vmem>>, vector<1x256xf32>
    %12 = vector.broadcast %11 : vector<1x256xf32> to vector<112x256xf32>
    %13 = arith.addf %10, %12 : vector<112x256xf32>
    %cst_11 = arith.constant 0.000000e+00 : f32
    %14 = vector.broadcast %cst_11 : f32 to vector<112x256xf32>
    %15 = arith.maximumf %13, %14 : vector<112x256xf32>
    %16 = arith.truncf %15 : vector<112x256xf32> to vector<112x256xbf16>
    %c0_12 = arith.constant 0 : index
    %c0_13 = arith.constant 0 : index
    %17 = vector.load %arg6[%c0_12, %c0_13] : memref<256x128xbf16, #tpu.memory_space<vmem>>, vector<256x128xbf16>
    %cst_14 = arith.constant dense<0.000000e+00> : vector<112x128xf32>
    %18 = tpu.matmul %16, %17, %cst_14 {dimension_numbers = #tpu.dot_dimension_numbers<[1], [0], [0], [1], [0, 0, 1, 1], [], []>} : vector<112x256xbf16>, vector<256x128xbf16>, vector<112x128xf32> -> vector<112x128xf32>
    %c0_15 = arith.constant 0 : index
    %c0_16 = arith.constant 0 : index
    %19 = vector.load %arg7[%c0_15, %c0_16] : memref<1x128xf32, #tpu.memory_space<vmem>>, vector<1x128xf32>
    %20 = vector.broadcast %19 : vector<1x128xf32> to vector<112x128xf32>
    %21 = arith.addf %18, %20 : vector<112x128xf32>
    %c0_17 = arith.constant 0 : index
    %c0_18 = arith.constant 0 : index
    %22 = vector.load %arg8[%c0_17, %c0_18] : memref<112x128xf32, #tpu.memory_space<vmem>>, vector<112x128xf32>
    tpu.vector_store %arg8[%c0_17, %c0_18], %21 {strides = array<i32>} : memref<112x128xf32, #tpu.memory_space<vmem>>, vector<112x128xf32>,
    return
  }
  func.func @transform_0(%arg0: i32) -> (i32, i32) {
    %c0_i32 = arith.constant 0 : i32
    %c0_i32_0 = arith.constant 0 : i32
    return %arg0, %c0_i32 : i32, i32
  }
  func.func @transform_1(%arg0: i32) -> (i32, i32) {
    %c0_i32 = arith.constant 0 : i32
    %c0_i32_0 = arith.constant 0 : i32
    %c0_i32_1 = arith.constant 0 : i32
    return %c0_i32, %c0_i32_0 : i32, i32
  }
  func.func @transform_2(%arg0: i32) -> (i32, i32) {
    %c0_i32 = arith.constant 0 : i32
    %c0_i32_0 = arith.constant 0 : i32
    %c0_i32_1 = arith.constant 0 : i32
    return %c0_i32, %c0_i32_0 : i32, i32
  }
  func.func @transform_3(%arg0: i32) -> (i32, i32) {
    %c0_i32 = arith.constant 0 : i32
    %c0_i32_0 = arith.constant 0 : i32
    %c0_i32_1 = arith.constant 0 : i32
    return %c0_i32, %c0_i32_0 : i32, i32
  }
  func.func @transform_4(%arg0: i32) -> (i32, i32) {
    %c0_i32 = arith.constant 0 : i32
    %c0_i32_0 = arith.constant 0 : i32
    %c0_i32_1 = arith.constant 0 : i32
    return %c0_i32, %c0_i32_0 : i32, i32
  }
  func.func @transform_5(%arg0: i32) -> (i32, i32) {
    %c0_i32 = arith.constant 0 : i32
    %c0_i32_0 = arith.constant 0 : i32
    %c0_i32_1 = arith.constant 0 : i32
    return %c0_i32, %c0_i32_0 : i32, i32
  }
  func.func @transform_6(%arg0: i32) -> (i32, i32) {
    %c0_i32 = arith.constant 0 : i32
    %c0_i32_0 = arith.constant 0 : i32
    %c0_i32_1 = arith.constant 0 : i32
    return %c0_i32, %c0_i32_0 : i32, i32
  }
  func.func @transform_7(%arg0: i32) -> (i32, i32) {
    %c0_i32 = arith.constant 0 : i32
    %c0_i32_0 = arith.constant 0 : i32
    return %arg0, %c0_i32 : i32, i32
  }
}

</mosaic_0001>

<llo_original>
// kernel: tpu_custom_call.1
$region0: #{tpu_custom_call.1}
  #allocation0 [shape = 'u32[]', space=smem, size = 0x4, offset = 0x4, fixed_abs, tag = 'smem constant byte address 0x4 - core index']
  #allocation1 [shape = 'u32[144,128]{1,0:T(1,128)}', space=vmem, size = 0x12000, scoped, tag = 'internal scratch']
  %s0 = inlined_call_operand.hbm [shape: bf16[200,128], index: 0, kind: input, shape index: {}]
  %s1 = inlined_call_operand.hbm [shape: bf16[128,1024], index: 1, kind: input, shape index: {}]
  %s2 = inlined_call_operand.hbm [shape: f32[1,1024], index: 2, kind: input, shape index: {}]
  %s3 = inlined_call_operand.hbm [shape: bf16[1024,256], index: 3, kind: input, shape index: {}]
  %s4 = inlined_call_operand.vmem [shape: f32[1,256], index: 4, kind: input, shape index: {}]
  %s5 = inlined_call_operand.hbm [shape: bf16[256,128], index: 5, kind: input, shape index: {}]
  %s6 = inlined_call_operand.vmem [shape: f32[1,128], index: 6, kind: input, shape index: {}]
  %s7 = inlined_call_operand.hbm [shape: f32[200,128], index: 7, kind: output, shape index: {}]
  %s8 = sld [smem:[#allocation0]]
  $region81: #{tpu_custom_call.1} parent=0
    _
  %s10 = ssub.s32 1, %s8
  %s11 = scalar_select 0, %s10, %s8
  $region1: #{tpu_custom_call.1} parent=0
    #allocation2 [shape = 'u8[57344]{0}', space=vmem, size = 0xe000, scoped, tag = 'input window, operand 0']
    #allocation3 [shape = 's32[2]{0}', space=sflag, size = 0x8, scoped, tag = 'scoped memory for tpu_custom_call.1']
    #allocation4 [shape = 's32[2]{0}', space=sflag, size = 0x8, scoped, tag = 'scoped memory for tpu_custom_call.1']
    #allocation5 [shape = 'u8[262144]{0}', space=vmem, size = 0x40000, scoped, tag = 'input window, operand 1, single buffered']
    #allocation6 [shape = 's32[1]{0}', space=sflag, size = 0x4, scoped, tag = 'scoped memory for tpu_custom_call.1']
    #allocation7 [shape = 'u8[4096]{0}', space=vmem, size = 0x1000, scoped, tag = 'input window, operand 2, single buffered']
    #allocation8 [shape = 'u8[524288]{0}', space=vmem, size = 0x80000, scoped, tag = 'input window, operand 3, single buffered']
    #allocation9 [shape = 's32[1]{0}', space=sflag, size = 0x4, scoped, tag = 'scoped memory for tpu_custom_call.1']
    #allocation10 [shape = 'u8[65536]{0}', space=vmem, size = 0x10000, scoped, tag = 'input window, operand 5, single buffered']
    #allocation11 [shape = 'u8[114688]{0}', space=vmem, size = 0x1c000, scoped, tag = 'output window, operand 0']
    %12 = vsyncpa [#allocation3], 0
    %s13 = scalar_lea.sflag [#allocation3], 1
    %14 = vsyncpa %s13, 0
    %15 = vsyncpa [#allocation6], 0
    %16 = vsyncpa [#allocation9], 0
    %17 = vsyncpa [#allocation4], 0
    %s18 = scalar_lea.sflag [#allocation4], 1
    %19 = vsyncpa %s18, 0
    loop: start=0, step=1, limit=4
    $region2: #{tpu_custom_call.1} parent=1 // loop_pre_header
      _
    $region3: #{tpu_custom_call.1} parent=1 // loop_header
      %s21 = sphi 0, %s25
      %p22 = scmp.ge.s32.totalorder %s21, 4
      %s31 = sphi 0, %s33
      %s34 = sphi 0, %s31
      %s35 = sphi 0, %s34
      %s51 = sphi 0, %s35
      %s55 = sphi 0, %s55
      %s57 = sphi 0, %s55
      %s58 = sphi 0, %s57
      %s72 = sphi 0, %s58
      %s76 = sphi 0, %s76
      %s78 = sphi 0, %s76
      %s79 = sphi 0, %s78
      %s93 = sphi 0, %s79
      %s97 = sphi 0, %s97
      %s99 = sphi 0, %s97
      %s100 = sphi 0, %s99
      %s114 = sphi 0, %s100
      %s118 = sphi 0, %s118
      %s120 = sphi 0, %s118
      %s121 = sphi 0, %s120
      %s135 = sphi 0, %s121
      %s139 = sphi 0, %s139
      %s141 = sphi 0, %s139
      %s142 = sphi 0, %s141
      %s156 = sphi 0, %s142
      %s160 = sphi 0, %s160
      %s162 = sphi 0, %s160
      %s163 = sphi 0, %s162
      %s177 = sphi 0, %s163
      %s183 = sphi 0, %s185
      %s186 = sphi 0, %s183
      %s187 = sphi 0, %s186
      %s203 = sphi 0, %s187
    $region4: #{tpu_custom_call.1} parent=1 // loop_header_branch
      %24 = sbr.rel (%p22) target = $region8
    $region5: #{tpu_custom_call.1} parent=1 // loop_body
      %s26 = ssub.s32 %s21, 1
      %s27 = ssub.s32 %s21, 2
      %s28 = sadd.s32 %s21, 1
      %s29 = ssub.s32 %s21, %s28
      %p30 = scmp.eq.s32.totalorder %s29, 0
      %s32 = sadd.s32 %s31, 1
      %s33 = scalar_select %p30, %s31, %s32
      %p36 = pneg %p30
      %p37 = scmp.eq.s32.totalorder %s21, 1
      %p38 = por %p36, %p37
      %p39 = scmp.ne.s32.totalorder %s31, %s34
      %p40 = scmp.eq.s32.totalorder %s21, 0
      %p41 = por %p39, %p40
      %p42 = scmp.ne.s32.totalorder %s31, %s34
      %p43 = scmp.eq.s32.totalorder %s26, 1
      %p44 = por %p42, %p43
      %p45 = scmp.ne.s32.totalorder %s34, %s35
      %p46 = scmp.eq.s32.totalorder %s26, 0
      %p47 = por %p45, %p46
      %p48 = scmp.ne.s32.totalorder %s34, %s35
      %p49 = scmp.eq.s32.totalorder %s27, 1
      %p50 = por %p48, %p49
      %p52 = scmp.ne.s32.totalorder %s35, %s51
      %p53 = scmp.eq.s32.totalorder %s27, 0
      %p54 = por %p52, %p53
      %s56 = sadd.s32 %s55, 1
      %p59 = scmp.eq.s32.totalorder %s21, 1
      %p60 = scmp.ne.s32.totalorder %s55, %s57
      %p61 = scmp.eq.s32.totalorder %s21, 0
      %p62 = por %p60, %p61
      %p63 = scmp.ne.s32.totalorder %s55, %s57
      %p64 = scmp.eq.s32.totalorder %s26, 1
      %p65 = por %p63, %p64
      %p66 = scmp.ne.s32.totalorder %s57, %s58
      %p67 = scmp.eq.s32.totalorder %s26, 0
      %p68 = por %p66, %p67
      %p69 = scmp.ne.s32.totalorder %s57, %s58
      %p70 = scmp.eq.s32.totalorder %s27, 1
      %p71 = por %p69, %p70
      %p73 = scmp.ne.s32.totalorder %s58, %s72
      %p74 = scmp.eq.s32.totalorder %s27, 0
      %p75 = por %p73, %p74
      %s77 = sadd.s32 %s76, 1
      %p80 = scmp.eq.s32.totalorder %s21, 1
      %p81 = scmp.ne.s32.totalorder %s76, %s78
      %p82 = scmp.eq.s32.totalorder %s21, 0
      %p83 = por %p81, %p82
      %p84 = scmp.ne.s32.totalorder %s76, %s78
      %p85 = scmp.eq.s32.totalorder %s26, 1
      %p86 = por %p84, %p85
      %p87 = scmp.ne.s32.totalorder %s78, %s79
      %p88 = scmp.eq.s32.totalorder %s26, 0
      %p89 = por %p87, %p88
      %p90 = scmp.ne.s32.totalorder %s78, %s79
      %p91 = scmp.eq.s32.totalorder %s27, 1
      %p92 = por %p90, %p91
      %p94 = scmp.ne.s32.totalorder %s79, %s93
      %p95 = scmp.eq.s32.totalorder %s27, 0
      %p96 = por %p94, %p95
      %s98 = sadd.s32 %s97, 1
      %p101 = scmp.eq.s32.totalorder %s21, 1
      %p102 = scmp.ne.s32.totalorder %s97, %s99
      %p103 = scmp.eq.s32.totalorder %s21, 0
      %p104 = por %p102, %p103
      %p105 = scmp.ne.s32.totalorder %s97, %s99
      %p106 = scmp.eq.s32.totalorder %s26, 1
      %p107 = por %p105, %p106
      %p108 = scmp.ne.s32.totalorder %s99, %s100
      %p109 = scmp.eq.s32.totalorder %s26, 0
      %p110 = por %p108, %p109
      %p111 = scmp.ne.s32.totalorder %s99, %s100
      %p112 = scmp.eq.s32.totalorder %s27, 1
      %p113 = por %p111, %p112
      %p115 = scmp.ne.s32.totalorder %s100, %s114
      %p116 = scmp.eq.s32.totalorder %s27, 0
      %p117 = por %p115, %p116
      %s119 = sadd.s32 %s118, 1
      %p122 = scmp.eq.s32.totalorder %s21, 1
      %p123 = scmp.ne.s32.totalorder %s118, %s120
      %p124 = scmp.eq.s32.totalorder %s21, 0
      %p125 = por %p123, %p124
      %p126 = scmp.ne.s32.totalorder %s118, %s120
      %p127 = scmp.eq.s32.totalorder %s26, 1
      %p128 = por %p126, %p127
      %p129 = scmp.ne.s32.totalorder %s120, %s121
      %p130 = scmp.eq.s32.totalorder %s26, 0
      %p131 = por %p129, %p130
      %p132 = scmp.ne.s32.totalorder %s120, %s121
      %p133 = scmp.eq.s32.totalorder %s27, 1
      %p134 = por %p132, %p133
      %p136 = scmp.ne.s32.totalorder %s121, %s135
      %p137 = scmp.eq.s32.totalorder %s27, 0
      %p138 = por %p136, %p137
      %s140 = sadd.s32 %s139, 1
      %p143 = scmp.eq.s32.totalorder %s21, 1
      %p144 = scmp.ne.s32.totalorder %s139, %s141
      %p145 = scmp.eq.s32.totalorder %s21, 0
      %p146 = por %p144, %p145
      %p147 = scmp.ne.s32.totalorder %s139, %s141
      %p148 = scmp.eq.s32.totalorder %s26, 1
      %p149 = por %p147, %p148
      %p150 = scmp.ne.s32.totalorder %s141, %s142
      %p151 = scmp.eq.s32.totalorder %s26, 0
      %p152 = por %p150, %p151
      %p153 = scmp.ne.s32.totalorder %s141, %s142
      %p154 = scmp.eq.s32.totalorder %s27, 1
      %p155 = por %p153, %p154
      %p157 = scmp.ne.s32.totalorder %s142, %s156
      %p158 = scmp.eq.s32.totalorder %s27, 0
      %p159 = por %p157, %p158
      %s161 = sadd.s32 %s160, 1
      %p164 = scmp.eq.s32.totalorder %s21, 1
      %p165 = scmp.ne.s32.totalorder %s160, %s162
      %p166 = scmp.eq.s32.totalorder %s21, 0
      %p167 = por %p165, %p166
      %p168 = scmp.ne.s32.totalorder %s160, %s162
      %p169 = scmp.eq.s32.totalorder %s26, 1
      %p170 = por %p168, %p169
      %p171 = scmp.ne.s32.totalorder %s162, %s163
      %p172 = scmp.eq.s32.totalorder %s26, 0
      %p173 = por %p171, %p172
      %p174 = scmp.ne.s32.totalorder %s162, %s163
      %p175 = scmp.eq.s32.totalorder %s27, 1
      %p176 = por %p174, %p175
      %p178 = scmp.ne.s32.totalorder %s163, %s177
      %p179 = scmp.eq.s32.totalorder %s27, 0
      %p180 = por %p178, %p179
      %s181 = ssub.s32 %s21, %s28
      %p182 = scmp.eq.s32.totalorder %s181, 0
      %s184 = sadd.s32 %s183, 1
      %s185 = scalar_select %p182, %s183, %s184
      %p188 = pneg %p182
      %p189 = scmp.eq.s32.totalorder %s21, 1
      %p190 = por %p188, %p189
      %p191 = scmp.ne.s32.totalorder %s183, %s186
      %p192 = scmp.eq.s32.totalorder %s21, 0
      %p193 = por %p191, %p192
      %p194 = scmp.ne.s32.totalorder %s183, %s186
      %p195 = scmp.eq.s32.totalorder %s26, 1
      %p196 = por %p194, %p195
      %p197 = scmp.ne.s32.totalorder %s186, %s187
      %p198 = scmp.eq.s32.totalorder %s26, 0
      %p199 = por %p197, %p198
      %p200 = scmp.ne.s32.totalorder %s186, %s187
      %p201 = scmp.eq.s32.totalorder %s27, 1
      %p202 = por %p200, %p201
      %p204 = scmp.ne.s32.totalorder %s187, %s203
      %p205 = scmp.eq.s32.totalorder %s27, 0
      %p206 = por %p204, %p205
      %p207 = scmp.le.s32.totalorder 1, %s21
      %p208 = scmp.lt.s32.totalorder %s21, 3
      %p209 = pnand %p207, %p208
      %p210 = pneg %p209
      // Predicated region
      $region9: #{tpu_custom_call.1} parent=5 // pred_check
        _
      $region10: #{tpu_custom_call.1} parent=5 // pred_check_branch
        %212 = sbr.rel (%p209) target = $region12
      $region11: #{tpu_custom_call.1} parent=5 // pred_region
        %s213 = ssub.s32 %s21, 1
        // Predicated region
        $region13: #{tpu_custom_call.1} parent=11 // pred_check
          %p214 = pneg %p68
        $region14: #{tpu_custom_call.1} parent=11 // pred_check_branch
          %216 = sbr.rel (%p214) target = $region16
        $region15: #{tpu_custom_call.1} parent=11 // pred_region
          %s218 = ssub.s32 8192, 8192
          %219 = vsyncadd [#allocation6], %s218
          %s220 = sshll.u32 [#allocation5], 4
          %s221 = int_to_ptr.vmem [resolvable:$true] %s220
          %226 = dma.hbm_to_vmem [thread:$0]  %s1, 8192, %s221, [#allocation6], 512, 512, 32
        $region16: #{tpu_custom_call.1} parent=11 // pred_fallthru
          _
        // Predicated region
        $region17: #{tpu_custom_call.1} parent=11 // pred_check
          %p227 = pneg %p89
        $region18: #{tpu_custom_call.1} parent=11 // pred_check_branch
          %229 = sbr.rel (%p227) target = $region20
        $region19: #{tpu_custom_call.1} parent=11 // pred_region
          %s231 = ssub.s32 128, 128
          %232 = vsyncadd [#allocation6], %s231
          %s234 = sshll.u32 [#allocation7], 4
          %s235 = int_to_ptr.vmem [resolvable:$true] %s234
          %237 = dma.hbm_to_vmem [thread:$0]  %s2, 128, %s235, [#allocation6]
        $region20: #{tpu_custom_call.1} parent=11 // pred_fallthru
          _
        // Predicated region
        $region21: #{tpu_custom_call.1} parent=11 // pred_check
          %p238 = pneg %p110
        $region22: #{tpu_custom_call.1} parent=11 // pred_check_branch
          %240 = sbr.rel (%p238) target = $region24
        $region23: #{tpu_custom_call.1} parent=11 // pred_region
          %s242 = ssub.s32 16384, 16384
          %243 = vsyncadd [#allocation9], %s242
          %s244 = sshll.u32 [#allocation8], 4
          %s245 = int_to_ptr.vmem [resolvable:$true] %s244
          %250 = dma.hbm_to_vmem [thread:$0]  %s3, 16384, %s245, [#allocation9], 128, 128, 8
        $region24: #{tpu_custom_call.1} parent=11 // pred_fallthru
          _
        // Predicated region
        $region25: #{tpu_custom_call.1} parent=11 // pred_check
          %p251 = pneg %p131
        $region26: #{tpu_custom_call.1} parent=11 // pred_check_branch
          %253 = sbr.rel (%p251) target = $region28
        $region27: #{tpu_custom_call.1} parent=11 // pred_region
          _
        $region28: #{tpu_custom_call.1} parent=11 // pred_fallthru
          _
        // Predicated region
        $region29: #{tpu_custom_call.1} parent=11 // pred_check
          %p254 = pneg %p152
        $region30: #{tpu_custom_call.1} parent=11 // pred_check_branch
          %256 = sbr.rel (%p254) target = $region32
        $region31: #{tpu_custom_call.1} parent=11 // pred_region
          %s258 = ssub.s32 2048, 2048
          %259 = vsyncadd [#allocation9], %s258
          %s260 = sshll.u32 [#allocation10], 4
          %s261 = int_to_ptr.vmem [resolvable:$true] %s260
          %266 = dma.hbm_to_vmem [thread:$0]  %s5, 2048, %s261, [#allocation9], 64, 64, 4
        $region32: #{tpu_custom_call.1} parent=11 // pred_fallthru
          _
        // Predicated region
        $region33: #{tpu_custom_call.1} parent=11 // pred_check
          %p267 = pneg %p173
        $region34: #{tpu_custom_call.1} parent=11 // pred_check_branch
          %269 = sbr.rel (%p267) target = $region36
        $region35: #{tpu_custom_call.1} parent=11 // pred_region
          _
        $region36: #{tpu_custom_call.1} parent=11 // pred_fallthru
          _
      $region12: #{tpu_custom_call.1} parent=5 // pred_fallthru
        _
      %p270 = scmp.lt.s32.totalorder %s21, 2
      // Predicated region
      $region37: #{tpu_custom_call.1} parent=5 // pred_check
        %p271 = pneg %p270
      $region38: #{tpu_custom_call.1} parent=5 // pred_check_branch
        %273 = sbr.rel (%p271) target = $region40
      $region39: #{tpu_custom_call.1} parent=5 // pred_region
        // Predicated region
        $region41: #{tpu_custom_call.1} parent=39 // pred_check
          %p274 = pneg %p41
        $region42: #{tpu_custom_call.1} parent=39 // pred_check_branch
          %276 = sbr.rel (%p274) target = $region44
        $region43: #{tpu_custom_call.1} parent=39 // pred_region
          %s277 = sand.u32 %s31, 1
          %s278 = scalar_lea.sflag [#allocation3], %s277
          %s279 = sand.u32 %s31, 1
          %s280 = smul.addr %s279, 56
          %s281 = scalar_lea.vmem [#allocation2], %s280
          %s282 = smul.u32 14, %s21
          %s283 = ssub.s32 25, %s282
          %p284 = scmp.lt.s32.totalorder %s283, 14
          %s285 = scalar_select %p284, %s283, 14
          %s286 = smul.u32 64, %s285
          %s288 = ssub.s32 896, %s286
          %289 = vsyncadd %s278, %s288
          %p290 = scmp.ne.s32.totalorder 0, %s286
          %s291 = smul.addr %s282, 64
          %s292 = scalar_lea.hbm %s0, %s291
          %s293 = smul.u32 4, %s285
          %s294 = sshll.u32 %s281, 4
          %s295 = int_to_ptr.vmem [resolvable:$true] %s294
          %s296 = sshll.u32 %s293, 4
          %300 = dma.hbm_to_vmem [thread:$0]  (%p290), %s292, %s296, %s295, %s278, 64, 64, 4
        $region44: #{tpu_custom_call.1} parent=39 // pred_fallthru
          _
      $region40: #{tpu_custom_call.1} parent=5 // pred_fallthru
        _
      %p301 = scmp.le.s32.totalorder 1, %s21
      %p302 = scmp.lt.s32.totalorder %s21, 3
      %p303 = pnand %p301, %p302
      %p304 = pneg %p303
      // Predicated region
      $region45: #{tpu_custom_call.1} parent=5 // pred_check
        _
      $region46: #{tpu_custom_call.1} parent=5 // pred_check_branch
        %306 = sbr.rel (%p303) target = $region48
      $region47: #{tpu_custom_call.1} parent=5 // pred_region
        %s307 = ssub.s32 %s21, 1
        %s308 = sand.u32 %s34, 1
        %s309 = scalar_lea.sflag [#allocation3], %s308
        %s310 = sand.u32 %s34, 1
        %s311 = smul.addr %s310, 56
        %s312 = scalar_lea.vmem [#allocation2], %s311
        // Predicated region
        $region49: #{tpu_custom_call.1} parent=47 // pred_check
          %p313 = pneg %p47
        $region50: #{tpu_custom_call.1} parent=47 // pred_check_branch
          %315 = sbr.rel (%p313) target = $region52
        $region51: #{tpu_custom_call.1} parent=47 // pred_region
          %316 = dma.done %s309, 896
        $region52: #{tpu_custom_call.1} parent=47 // pred_fallthru
          _
        // Predicated region
        $region53: #{tpu_custom_call.1} parent=47 // pred_check
          %p317 = pneg %p68
        $region54: #{tpu_custom_call.1} parent=47 // pred_check_branch
          %319 = sbr.rel (%p317) target = $region56
        $region55: #{tpu_custom_call.1} parent=47 // pred_region
          %320 = dma.done [#allocation6], 8192
        $region56: #{tpu_custom_call.1} parent=47 // pred_fallthru
          _
        // Predicated region
        $region57: #{tpu_custom_call.1} parent=47 // pred_check
          %p321 = pneg %p89
        $region58: #{tpu_custom_call.1} parent=47 // pred_check_branch
          %323 = sbr.rel (%p321) target = $region60
        $region59: #{tpu_custom_call.1} parent=47 // pred_region
          %324 = dma.done [#allocation6], 128
        $region60: #{tpu_custom_call.1} parent=47 // pred_fallthru
          _
        // Predicated region
        $region61: #{tpu_custom_call.1} parent=47 // pred_check
          %p325 = pneg %p110
        $region62: #{tpu_custom_call.1} parent=47 // pred_check_branch
          %327 = sbr.rel (%p325) target = $region64
        $region63: #{tpu_custom_call.1} parent=47 // pred_region
          %328 = dma.done [#allocation9], 16384
        $region64: #{tpu_custom_call.1} parent=47 // pred_fallthru
          _
        // Predicated region
        $region65: #{tpu_custom_call.1} parent=47 // pred_check
          %p329 = pneg %p152
        $region66: #{tpu_custom_call.1} parent=47 // pred_check_branch
          %331 = sbr.rel (%p329) target = $region68
        $region67: #{tpu_custom_call.1} parent=47 // pred_region
          %332 = dma.done [#allocation9], 2048
        $region68: #{tpu_custom_call.1} parent=47 // pred_fallthru
          _
        %s333 = sand.u32 %s34, 1
        %s334 = scalar_lea.sflag [#allocation3], %s333
        %s335 = sand.u32 %s34, 1
        %s336 = smul.addr %s335, 56
        %s337 = scalar_lea.vmem [#allocation2], %s336
        %p338 = pneg %p47
        %p339 = pneg %p44
        %p340 = pneg %p68
        %p341 = pneg %p65
        %p342 = pneg %p89
        %p343 = pneg %p86
        %p344 = pneg %p110
        %p345 = pneg %p107
        %p346 = pneg %p131
        %p347 = pneg %p128
        %p348 = pneg %p152
        %p349 = pneg %p149
        %p350 = pneg %p173
        %p351 = pneg %p170
        %p352 = pneg %p199
        %p353 = pneg %p196
        %s354 = sand.u32 %s186, 1
        %s355 = scalar_lea.sflag [#allocation4], %s354
        %s356 = sand.u32 %s186, 1
        %s357 = smul.addr %s356, 112
        %s358 = scalar_lea.vmem [#allocation11], %s357
        %s359 = smul.u32 14, %s26
        %s360 = ssub.s32 25, %s359
        %p361 = scmp.lt.s32.totalorder %s360, 14
        %s362 = scalar_select %p361, %s360, 14
        %s363 = smul.u32 64, %s362
        %s364 = smul.u32 14, %s26
        %s365 = ssub.s32 25, %s364
        %p366 = scmp.lt.s32.totalorder %s365, 14
        %s367 = scalar_select %p366, %s365, 14
        %s368 = smul.u32 128, %s367
        %v370 = vld [vmem:[%s312] sm:$0xf]
        %v371 = vld [vmem:[%s312 + $0x4] sm:$0xf]
        %v372 = vld [vmem:[%s312 + $0x8] sm:$0xf]
        %v373 = vld [vmem:[%s312 + $0xc] sm:$0xf]
        %v374 = vld [vmem:[%s312 + $0x10] sm:$0xf]
        %v375 = vld [vmem:[%s312 + $0x14] sm:$0xf]
        %v376 = vld [vmem:[%s312 + $0x18] sm:$0xf]
        %v377 = vld [vmem:[%s312 + $0x1c] sm:$0xf]
        %v378 = vld [vmem:[%s312 + $0x20] sm:$0xf]
        %v379 = vld [vmem:[%s312 + $0x24] sm:$0xf]
        %v380 = vld [vmem:[%s312 + $0x28] sm:$0xf]
        %v381 = vld [vmem:[%s312 + $0x2c] sm:$0xf]
        %v382 = vld [vmem:[%s312 + $0x30] sm:$0xf]
        %v383 = vld [vmem:[%s312 + $0x34] sm:$0xf]
        %v384 = vld [vmem:[#allocation5] sm:$0xff]
        %v385 = vld [vmem:[#allocation5 + $0x8] sm:$0xff]
        %v386 = vld [vmem:[#allocation5 + $0x10] sm:$0xff]
        %v387 = vld [vmem:[#allocation5 + $0x18] sm:$0xff]
        %v388 = vld [vmem:[#allocation5 + $0x20] sm:$0xff]
        %v389 = vld [vmem:[#allocation5 + $0x28] sm:$0xff]
        %v390 = vld [vmem:[#allocation5 + $0x30] sm:$0xff]
        %v391 = vld [vmem:[#allocation5 + $0x38] sm:$0xff]
        %v392 = vld [vmem:[#allocation5 + $0x40] sm:$0xff]
        %v393 = vld [vmem:[#allocation5 + $0x48] sm:$0xff]
        %v394 = vld [vmem:[#allocation5 + $0x50] sm:$0xff]
        %v395 = vld [vmem:[#allocation5 + $0x58] sm:$0xff]
        %v396 = vld [vmem:[#allocation5 + $0x60] sm:$0xff]
        %v397 = vld [vmem:[#allocation5 + $0x68] sm:$0xff]
        %v398 = vld [vmem:[#allocation5 + $0x70] sm:$0xff]
        %v399 = vld [vmem:[#allocation5 + $0x78] sm:$0xff]
        %v400 = vld [vmem:[#allocation5 + $0x80] sm:$0xff]
        %v401 = vld [vmem:[#allocation5 + $0x88] sm:$0xff]
        %v402 = vld [vmem:[#allocation5 + $0x90] sm:$0xff]
        %v403 = vld [vmem:[#allocation5 + $0x98] sm:$0xff]
        %v404 = vld [vmem:[#allocation5 + $0xa0] sm:$0xff]
        %v405 = vld [vmem:[#allocation5 + $0xa8] sm:$0xff]
        %v406 = vld [vmem:[#allocation5 + $0xb0] sm:$0xff]
        %v407 = vld [vmem:[#allocation5 + $0xb8] sm:$0xff]
        %v408 = vld [vmem:[#allocation5 + $0xc0] sm:$0xff]
        %v409 = vld [vmem:[#allocation5 + $0xc8] sm:$0xff]
        %v410 = vld [vmem:[#allocation5 + $0xd0] sm:$0xff]
        %v411 = vld [vmem:[#allocation5 + $0xd8] sm:$0xff]
        %v412 = vld [vmem:[#allocation5 + $0xe0] sm:$0xff]
        %v413 = vld [vmem:[#allocation5 + $0xe8] sm:$0xff]
        %v414 = vld [vmem:[#allocation5 + $0xf0] sm:$0xff]
        %v415 = vld [vmem:[#allocation5 + $0xf8] sm:$0xff]
        %v416 = vld [vmem:[#allocation5 + $0x100] sm:$0xff]
        %v417 = vld [vmem:[#allocation5 + $0x108] sm:$0xff]
        %v418 = vld [vmem:[#allocation5 + $0x110] sm:$0xff]
        %v419 = vld [vmem:[#allocation5 + $0x118] sm:$0xff]
        %v420 = vld [vmem:[#allocation5 + $0x120] sm:$0xff]
        %v421 = vld [vmem:[#allocation5 + $0x128] sm:$0xff]
        %v422 = vld [vmem:[#allocation5 + $0x130] sm:$0xff]
        %v423 = vld [vmem:[#allocation5 + $0x138] sm:$0xff]
        %v424 = vld [vmem:[#allocation5 + $0x140] sm:$0xff]
        %v425 = vld [vmem:[#allocation5 + $0x148] sm:$0xff]
        %v426 = vld [vmem:[#allocation5 + $0x150] sm:$0xff]
        %v427 = vld [vmem:[#allocation5 + $0x158] sm:$0xff]
        %v428 = vld [vmem:[#allocation5 + $0x160] sm:$0xff]
        %v429 = vld [vmem:[#allocation5 + $0x168] sm:$0xff]
        %v430 = vld [vmem:[#allocation5 + $0x170] sm:$0xff]
        %v431 = vld [vmem:[#allocation5 + $0x178] sm:$0xff]
        %v432 = vld [vmem:[#allocation5 + $0x180] sm:$0xff]
        %v433 = vld [vmem:[#allocation5 + $0x188] sm:$0xff]
        %v434 = vld [vmem:[#allocation5 + $0x190] sm:$0xff]
        %v435 = vld [vmem:[#allocation5 + $0x198] sm:$0xff]
        %v436 = vld [vmem:[#allocation5 + $0x1a0] sm:$0xff]
        %v437 = vld [vmem:[#allocation5 + $0x1a8] sm:$0xff]
        %v438 = vld [vmem:[#allocation5 + $0x1b0] sm:$0xff]
        %v439 = vld [vmem:[#allocation5 + $0x1b8] sm:$0xff]
        %v440 = vld [vmem:[#allocation5 + $0x1c0] sm:$0xff]
        %v441 = vld [vmem:[#allocation5 + $0x1c8] sm:$0xff]
        %v442 = vld [vmem:[#allocation5 + $0x1d0] sm:$0xff]
        %v443 = vld [vmem:[#allocation5 + $0x1d8] sm:$0xff]
        %v444 = vld [vmem:[#allocation5 + $0x1e0] sm:$0xff]
        %v445 = vld [vmem:[#allocation5 + $0x1e8] sm:$0xff]
        %v446 = vld [vmem:[#allocation5 + $0x1f0] sm:$0xff]
        %v447 = vld [vmem:[#allocation5 + $0x1f8] sm:$0xff]
        %v448 = vld [vmem:[#allocation7] sm:$0xff]
        %v450 = vlaneseq
        %v451 = vshrl.u32 %v450, 7
        %v452 = vsub.s32 0, %v451
        %v453 = vrot.slane %v448, %v452
        %v454 = vlaneseq
        %v455 = vshrl.u32 %v454, 7
        %v456 = vsub.s32 1, %v455
        %v457 = vrot.slane %v448, %v456
        %v458 = vlaneseq
        %v459 = vshrl.u32 %v458, 7
        %v460 = vsub.s32 2, %v459
        %v461 = vrot.slane %v448, %v460
        %v462 = vlaneseq
        %v463 = vshrl.u32 %v462, 7
        %v464 = vsub.s32 3, %v463
        %v465 = vrot.slane %v448, %v464
        %v466 = vlaneseq
        %v467 = vshrl.u32 %v466, 7
        %v468 = vsub.s32 4, %v467
        %v469 = vrot.slane %v448, %v468
        %v470 = vlaneseq
        %v471 = vshrl.u32 %v470, 7
        %v472 = vsub.s32 5, %v471
        %v473 = vrot.slane %v448, %v472
        %v474 = vlaneseq
        %v475 = vshrl.u32 %v474, 7
        %v476 = vsub.s32 6, %v475
        %v477 = vrot.slane %v448, %v476
        %v478 = vlaneseq
        %v479 = vshrl.u32 %v478, 7
        %v480 = vsub.s32 7, %v479
        %v481 = vrot.slane %v448, %v480
        %v504 = vunpack.c.l.b16 %v370
        %v505 = vunpack.c.l.b16 %v371
        %v506 = vunpack.c.l.b16 %v372
        %v507 = vunpack.c.l.b16 %v373
        %v508 = vunpack.c.l.b16 %v374
        %v509 = vunpack.c.l.b16 %v375
        %v510 = vunpack.c.l.b16 %v376
        %v511 = vunpack.c.l.b16 %v377
        %v512 = vunpack.c.l.b16 %v378
        %v513 = vunpack.c.l.b16 %v379
        %v514 = vunpack.c.l.b16 %v380
        %v515 = vunpack.c.l.b16 %v381
        %v516 = vunpack.c.l.b16 %v382
        %v517 = vunpack.c.l.b16 %v383
        %v518 = vpack.c.b16 %v505, %v504
        %v519 = vpack.c.b16 %v507, %v506
        %v520 = vpack.c.b16 %v509, %v508
        %v521 = vpack.c.b16 %v511, %v510
        %v522 = vpack.c.b16 %v513, %v512
        %v523 = vpack.c.b16 %v515, %v514
        %v524 = vpack.c.b16 %v517, %v516
        %v596 = vunpack.c.l.b16 %v384
        %v597 = vunpack.c.h.b16 %v384
        %v598 = vunpack.c.l.b16 %v385
        %v599 = vunpack.c.h.b16 %v385
        %v600 = vunpack.c.l.b16 %v386
        %v601 = vunpack.c.h.b16 %v386
        %v602 = vunpack.c.l.b16 %v387
        %v603 = vunpack.c.h.b16 %v387
        %v604 = vunpack.c.l.b16 %v388
        %v605 = vunpack.c.h.b16 %v388
        %v606 = vunpack.c.l.b16 %v389
        %v607 = vunpack.c.h.b16 %v389
        %v608 = vunpack.c.l.b16 %v390
        %v609 = vunpack.c.h.b16 %v390
        %v610 = vunpack.c.l.b16 %v391
        %v611 = vunpack.c.h.b16 %v391
        %v612 = vunpack.c.l.b16 %v392
        %v613 = vunpack.c.h.b16 %v392
        %v614 = vunpack.c.l.b16 %v393
        %v615 = vunpack.c.h.b16 %v393
        %v616 = vunpack.c.l.b16 %v394
        %v617 = vunpack.c.h.b16 %v394
        %v618 = vunpack.c.l.b16 %v395
        %v619 = vunpack.c.h.b16 %v395
        %v620 = vunpack.c.l.b16 %v396
        %v621 = vunpack.c.h.b16 %v396
        %v622 = vunpack.c.l.b16 %v397
        %v623 = vunpack.c.h.b16 %v397
        %v624 = vunpack.c.l.b16 %v398
        %v625 = vunpack.c.h.b16 %v398
        %v626 = vunpack.c.l.b16 %v399
        %v627 = vunpack.c.h.b16 %v399
        %v628 = vunpack.c.l.b16 %v400
        %v629 = vunpack.c.h.b16 %v400
        %v630 = vunpack.c.l.b16 %v401
        %v631 = vunpack.c.h.b16 %v401
        %v632 = vunpack.c.l.b16 %v402
        %v633 = vunpack.c.h.b16 %v402
        %v634 = vunpack.c.l.b16 %v403
        %v635 = vunpack.c.h.b16 %v403
        %v636 = vunpack.c.l.b16 %v404
        %v637 = vunpack.c.h.b16 %v404
        %v638 = vunpack.c.l.b16 %v405
        %v639 = vunpack.c.h.b16 %v405
        %v640 = vunpack.c.l.b16 %v406
        %v641 = vunpack.c.h.b16 %v406
        %v642 = vunpack.c.l.b16 %v407
        %v643 = vunpack.c.h.b16 %v407
        %v644 = vunpack.c.l.b16 %v408
        %v645 = vunpack.c.h.b16 %v408
        %v646 = vunpack.c.l.b16 %v409
        %v647 = vunpack.c.h.b16 %v409
        %v648 = vunpack.c.l.b16 %v410
        %v649 = vunpack.c.h.b16 %v410
        %v650 = vunpack.c.l.b16 %v411
        %v651 = vunpack.c.h.b16 %v411
        %v652 = vunpack.c.l.b16 %v412
        %v653 = vunpack.c.h.b16 %v412
        %v654 = vunpack.c.l.b16 %v413
        %v655 = vunpack.c.h.b16 %v413
        %v656 = vunpack.c.l.b16 %v414
        %v657 = vunpack.c.h.b16 %v414
        %v658 = vunpack.c.l.b16 %v415
        %v659 = vunpack.c.h.b16 %v415
        %v660 = vunpack.c.l.b16 %v416
        %v661 = vunpack.c.h.b16 %v416
        %v662 = vunpack.c.l.b16 %v417
        %v663 = vunpack.c.h.b16 %v417
        %v664 = vunpack.c.l.b16 %v418
        %v665 = vunpack.c.h.b16 %v418
        %v666 = vunpack.c.l.b16 %v419
        %v667 = vunpack.c.h.b16 %v419
        %v668 = vunpack.c.l.b16 %v420
        %v669 = vunpack.c.h.b16 %v420
        %v670 = vunpack.c.l.b16 %v421
        %v671 = vunpack.c.h.b16 %v421
        %v672 = vunpack.c.l.b16 %v422
        %v673 = vunpack.c.h.b16 %v422
        %v674 = vunpack.c.l.b16 %v423
        %v675 = vunpack.c.h.b16 %v423
        %v676 = vunpack.c.l.b16 %v424
        %v677 = vunpack.c.h.b16 %v424
        %v678 = vunpack.c.l.b16 %v425
        %v679 = vunpack.c.h.b16 %v425
        %v680 = vunpack.c.l.b16 %v426
        %v681 = vunpack.c.h.b16 %v426
        %v682 = vunpack.c.l.b16 %v427
        %v683 = vunpack.c.h.b16 %v427
        %v684 = vunpack.c.l.b16 %v428
        %v685 = vunpack.c.h.b16 %v428
        %v686 = vunpack.c.l.b16 %v429
        %v687 = vunpack.c.h.b16 %v429
        %v688 = vunpack.c.l.b16 %v430
        %v689 = vunpack.c.h.b16 %v430
        %v690 = vunpack.c.l.b16 %v431
        %v691 = vunpack.c.h.b16 %v431
        %v692 = vunpack.c.l.b16 %v432
        %v693 = vunpack.c.h.b16 %v432
        %v694 = vunpack.c.l.b16 %v433
        %v695 = vunpack.c.h.b16 %v433
        %v696 = vunpack.c.l.b16 %v434
        %v697 = vunpack.c.h.b16 %v434
        %v698 = vunpack.c.l.b16 %v435
        %v699 = vunpack.c.h.b16 %v435
        %v700 = vunpack.c.l.b16 %v436
        %v701 = vunpack.c.h.b16 %v436
        %v702 = vunpack.c.l.b16 %v437
        %v703 = vunpack.c.h.b16 %v437
        %v704 = vunpack.c.l.b16 %v438
        %v705 = vunpack.c.h.b16 %v438
        %v706 = vunpack.c.l.b16 %v439
        %v707 = vunpack.c.h.b16 %v439
        %v708 = vunpack.c.l.b16 %v440
        %v709 = vunpack.c.h.b16 %v440
        %v710 = vunpack.c.l.b16 %v441
        %v711 = vunpack.c.h.b16 %v441
        %v712 = vunpack.c.l.b16 %v442
        %v713 = vunpack.c.h.b16 %v442
        %v714 = vunpack.c.l.b16 %v443
        %v715 = vunpack.c.h.b16 %v443
        %v716 = vunpack.c.l.b16 %v444
        %v717 = vunpack.c.h.b16 %v444
        %v718 = vunpack.c.l.b16 %v445
        %v719 = vunpack.c.h.b16 %v445
        %v720 = vunpack.c.l.b16 %v446
        %v721 = vunpack.c.h.b16 %v446
        %v722 = vunpack.c.l.b16 %v447
        %v723 = vunpack.c.h.b16 %v447
        %v724 = vpack.c.b16 %v604, %v596
        %v725 = vpack.c.b16 %v605, %v597
        %v726 = vpack.c.b16 %v606, %v598
        %v727 = vpack.c.b16 %v607, %v599
        %v728 = vpack.c.b16 %v608, %v600
        %v729 = vpack.c.b16 %v609, %v601
        %v730 = vpack.c.b16 %v610, %v602
        %v731 = vpack.c.b16 %v611, %v603
        %v732 = vpack.c.b16 %v620, %v612
        %v733 = vpack.c.b16 %v621, %v613
        %v734 = vpack.c.b16 %v622, %v614
        %v735 = vpack.c.b16 %v623, %v615
        %v736 = vpack.c.b16 %v624, %v616
        %v737 = vpack.c.b16 %v625, %v617
        %v738 = vpack.c.b16 %v626, %v618
        %v739 = vpack.c.b16 %v627, %v619
        %v740 = vpack.c.b16 %v636, %v628
        %v741 = vpack.c.b16 %v637, %v629
        %v742 = vpack.c.b16 %v638, %v630
        %v743 = vpack.c.b16 %v639, %v631
        %v744 = vpack.c.b16 %v640, %v632
        %v745 = vpack.c.b16 %v641, %v633
        %v746 = vpack.c.b16 %v642, %v634
        %v747 = vpack.c.b16 %v643, %v635
        %v748 = vpack.c.b16 %v652, %v644
        %v749 = vpack.c.b16 %v653, %v645
        %v750 = vpack.c.b16 %v654, %v646
        %v751 = vpack.c.b16 %v655, %v647
        %v752 = vpack.c.b16 %v656, %v648
        %v753 = vpack.c.b16 %v657, %v649
        %v754 = vpack.c.b16 %v658, %v650
        %v755 = vpack.c.b16 %v659, %v651
        %v756 = vpack.c.b16 %v668, %v660
        %v757 = vpack.c.b16 %v669, %v661
        %v758 = vpack.c.b16 %v670, %v662
        %v759 = vpack.c.b16 %v671, %v663
        %v760 = vpack.c.b16 %v672, %v664
        %v761 = vpack.c.b16 %v673, %v665
        %v762 = vpack.c.b16 %v674, %v666
        %v763 = vpack.c.b16 %v675, %v667
        %v764 = vpack.c.b16 %v684, %v676
        %v765 = vpack.c.b16 %v685, %v677
        %v766 = vpack.c.b16 %v686, %v678
        %v767 = vpack.c.b16 %v687, %v679
        %v768 = vpack.c.b16 %v688, %v680
        %v769 = vpack.c.b16 %v689, %v681
        %v770 = vpack.c.b16 %v690, %v682
        %v771 = vpack.c.b16 %v691, %v683
        %v772 = vpack.c.b16 %v700, %v692
        %v773 = vpack.c.b16 %v701, %v693
        %v774 = vpack.c.b16 %v702, %v694
        %v775 = vpack.c.b16 %v703, %v695
        %v776 = vpack.c.b16 %v704, %v696
        %v777 = vpack.c.b16 %v705, %v697
        %v778 = vpack.c.b16 %v706, %v698
        %v779 = vpack.c.b16 %v707, %v699
        %v780 = vpack.c.b16 %v716, %v708
        %v781 = vpack.c.b16 %v717, %v709
        %v782 = vpack.c.b16 %v718, %v710
        %v783 = vpack.c.b16 %v719, %v711
        %v784 = vpack.c.b16 %v720, %v712
        %v785 = vpack.c.b16 %v721, %v713
        %v786 = vpack.c.b16 %v722, %v714
        %v787 = vpack.c.b16 %v723, %v715
        %852 = vmatprep.subr.bf16.mxu0 %v781
        %853 = vmatpush1.bf16.msra.mxu0 %v780
        %854 = vmatprep.subr.bf16.mxu0 %v773
        %855 = vmatpush1.bf16.msra.mxu0 %v772
        %856 = vmatprep.subr.bf16.mxu0 %v765
        %857 = vmatpush1.bf16.msra.mxu0 %v764
        %858 = vmatprep.subr.bf16.mxu0 %v757
        %859 = vmatpush1.bf16.msra.mxu0 %v756
        %860 = vmatprep.subr.bf16.mxu0 %v749
        %861 = vmatpush1.bf16.msra.mxu0 %v748
        %862 = vmatprep.subr.bf16.mxu0 %v741
        %863 = vmatpush1.bf16.msra.mxu0 %v740
        %864 = vmatprep.subr.bf16.mxu0 %v733
        %865 = vmatpush1.bf16.msra.mxu0 %v732
        %866 = vmatprep.subr.bf16.mxu0 %v725
        %867 = vmatpush1.bf16.msra.mxu0 %v724
        %868 = vmatprep.subr.bf16.mxu0 0
        %869 = vmatpush2.bf16.msra.mxu0 0
        %870 = vmatprep.subr.bf16.mxu0 0
        %871 = vmatpush2.bf16.msra.mxu0 0
        %872 = vmatprep.subr.bf16.mxu0 0
        %873 = vmatpush2.bf16.msra.mxu0 0
        %874 = vmatprep.subr.bf16.mxu0 0
        %875 = vmatpush2.bf16.msra.mxu0 0
        %876 = vmatprep.subr.bf16.mxu0 0
        %877 = vmatpush2.bf16.msra.mxu0 0
        %878 = vmatprep.subr.bf16.mxu0 0
        %879 = vmatpush2.bf16.msra.mxu0 0
        %880 = vmatprep.subr.bf16.mxu0 0
        %881 = vmatpush2.bf16.msra.mxu0 0
        %882 = vmatprep.subr.bf16.mxu0 0
        %883 = vmatpush2.bf16.msra.mxu0 0
        %884 = vmatprep.mubr.bf16.mxu0 0
        %885 = vmatmul.mubr.bf16.gmra.mxu0 %v518
        %v886 = vpop.f32.mrf.mxu0
        %v887 = vadd.f32 %v453, %v886
        %v888 = vpop.f32.mrf.mxu0
        %v889 = vadd.f32 %v457, %v888
        %v890 = vpop.f32.mrf.mxu0
        %v891 = vadd.f32 %v453, %v890
        %v892 = vpop.f32.mrf.mxu0
        %v893 = vadd.f32 %v457, %v892
        %894 = vmatprep.mubr.bf16.mxu0 0
        %895 = vmatmul.mubr.bf16.gmra.mxu0 %v519
        %v896 = vpop.f32.mrf.mxu0
        %v897 = vadd.f32 %v453, %v896
        %v898 = vpop.f32.mrf.mxu0
        %v899 = vadd.f32 %v457, %v898
        %v900 = vpop.f32.mrf.mxu0
        %v901 = vadd.f32 %v453, %v900
        %v902 = vpop.f32.mrf.mxu0
        %v903 = vadd.f32 %v457, %v902
        %904 = vmatprep.mubr.bf16.mxu0 0
        %905 = vmatmul.mubr.bf16.gmra.mxu0 %v520
        %v906 = vpop.f32.mrf.mxu0
        %v907 = vadd.f32 %v453, %v906
        %v908 = vpop.f32.mrf.mxu0
        %v909 = vadd.f32 %v457, %v908
        %v910 = vpop.f32.mrf.mxu0
        %v911 = vadd.f32 %v453, %v910
        %v912 = vpop.f32.mrf.mxu0
        %v913 = vadd.f32 %v457, %v912
        %914 = vmatprep.mubr.bf16.mxu0 0
        %915 = vmatmul.mubr.bf16.gmra.mxu0 %v521
        %v916 = vpop.f32.mrf.mxu0
        %v917 = vadd.f32 %v453, %v916
        %v918 = vpop.f32.mrf.mxu0
        %v919 = vadd.f32 %v457, %v918
        %v920 = vpop.f32.mrf.mxu0
        %v921 = vadd.f32 %v453, %v920
        %v922 = vpop.f32.mrf.mxu0
        %v923 = vadd.f32 %v457, %v922
        %924 = vmatprep.mubr.bf16.mxu0 0
        %925 = vmatmul.mubr.bf16.gmra.mxu0 %v522
        %v926 = vpop.f32.mrf.mxu0
        %v927 = vadd.f32 %v453, %v926
        %v928 = vpop.f32.mrf.mxu0
        %v929 = vadd.f32 %v457, %v928
        %v930 = vpop.f32.mrf.mxu0
        %v931 = vadd.f32 %v453, %v930
        %v932 = vpop.f32.mrf.mxu0
        %v933 = vadd.f32 %v457, %v932
        %934 = vmatprep.mubr.bf16.mxu0 0
        %935 = vmatmul.mubr.bf16.gmra.mxu0 %v523
        %v936 = vpop.f32.mrf.mxu0
        %v937 = vadd.f32 %v453, %v936
        %v938 = vpop.f32.mrf.mxu0
        %v939 = vadd.f32 %v457, %v938
        %v940 = vpop.f32.mrf.mxu0
        %v941 = vadd.f32 %v453, %v940
        %v942 = vpop.f32.mrf.mxu0
        %v943 = vadd.f32 %v457, %v942
        %944 = vmatprep.mubr.bf16.mxu0 0
        %945 = vmatmul.mubr.bf16.gmra.mxu0 %v524
        %v946 = vpop.f32.mrf.mxu0
        %v947 = vadd.f32 %v453, %v946
        %v948 = vpop.f32.mrf.mxu0
        %v949 = vadd.f32 %v457, %v948
        %v950 = vpop.f32.mrf.mxu0
        %v951 = vadd.f32 %v453, %v950
        %v952 = vpop.f32.mrf.mxu0
        %v953 = vadd.f32 %v457, %v952
        %954 = vdwg.mxu0
        %955 = vmatprep.subr.bf16.mxu0 %v783
        %956 = vmatpush1.bf16.msra.mxu0 %v782
        %957 = vmatprep.subr.bf16.mxu0 %v775
        %958 = vmatpush1.bf16.msra.mxu0 %v774
        %959 = vmatprep.subr.bf16.mxu0 %v767
        %960 = vmatpush1.bf16.msra.mxu0 %v766
        %961 = vmatprep.subr.bf16.mxu0 %v759
        %962 = vmatpush1.bf16.msra.mxu0 %v758
        %963 = vmatprep.subr.bf16.mxu0 %v751
        %964 = vmatpush1.bf16.msra.mxu0 %v750
        %965 = vmatprep.subr.bf16.mxu0 %v743
        %966 = vmatpush1.bf16.msra.mxu0 %v742
        %967 = vmatprep.subr.bf16.mxu0 %v735
        %968 = vmatpush1.bf16.msra.mxu0 %v734
        %969 = vmatprep.subr.bf16.mxu0 %v727
        %970 = vmatpush1.bf16.msra.mxu0 %v726
        %971 = vmatprep.subr.bf16.mxu0 0
        %972 = vmatpush2.bf16.msra.mxu0 0
        %973 = vmatprep.subr.bf16.mxu0 0
        %974 = vmatpush2.bf16.msra.mxu0 0
        %975 = vmatprep.subr.bf16.mxu0 0
        %976 = vmatpush2.bf16.msra.mxu0 0
        %977 = vmatprep.subr.bf16.mxu0 0
        %978 = vmatpush2.bf16.msra.mxu0 0
        %979 = vmatprep.subr.bf16.mxu0 0
        %980 = vmatpush2.bf16.msra.mxu0 0
        %981 = vmatprep.subr.bf16.mxu0 0
        %982 = vmatpush2.bf16.msra.mxu0 0
        %983 = vmatprep.subr.bf16.mxu0 0
        %984 = vmatpush2.bf16.msra.mxu0 0
        %985 = vmatprep.subr.bf16.mxu0 0
        %986 = vmatpush2.bf16.msra.mxu0 0
        %987 = vmatprep.mubr.bf16.mxu0 0
        %988 = vmatmul.mubr.bf16.gmra.mxu0 %v518
        %v989 = vpop.f32.mrf.mxu0
        %v990 = vadd.f32 %v461, %v989
        %v991 = vpop.f32.mrf.mxu0
        %v992 = vadd.f32 %v465, %v991
        %v993 = vpop.f32.mrf.mxu0
        %v994 = vadd.f32 %v461, %v993
        %v995 = vpop.f32.mrf.mxu0
        %v996 = vadd.f32 %v465, %v995
        %997 = vmatprep.mubr.bf16.mxu0 0
        %998 = vmatmul.mubr.bf16.gmra.mxu0 %v519
        %v999 = vpop.f32.mrf.mxu0
        %v1000 = vadd.f32 %v461, %v999
        %v1001 = vpop.f32.mrf.mxu0
        %v1002 = vadd.f32 %v465, %v1001
        %v1003 = vpop.f32.mrf.mxu0
        %v1004 = vadd.f32 %v461, %v1003
        %v1005 = vpop.f32.mrf.mxu0
        %v1006 = vadd.f32 %v465, %v1005
        %1007 = vmatprep.mubr.bf16.mxu0 0
        %1008 = vmatmul.mubr.bf16.gmra.mxu0 %v520
        %v1009 = vpop.f32.mrf.mxu0
        %v1010 = vadd.f32 %v461, %v1009
        %v1011 = vpop.f32.mrf.mxu0
        %v1012 = vadd.f32 %v465, %v1011
        %v1013 = vpop.f32.mrf.mxu0
        %v1014 = vadd.f32 %v461, %v1013
        %v1015 = vpop.f32.mrf.mxu0
        %v1016 = vadd.f32 %v465, %v1015
        %1017 = vmatprep.mubr.bf16.mxu0 0
        %1018 = vmatmul.mubr.bf16.gmra.mxu0 %v521
        %v1019 = vpop.f32.mrf.mxu0
        %v1020 = vadd.f32 %v461, %v1019
        %v1021 = vpop.f32.mrf.mxu0
        %v1022 = vadd.f32 %v465, %v1021
        %v1023 = vpop.f32.mrf.mxu0
        %v1024 = vadd.f32 %v461, %v1023
        %v1025 = vpop.f32.mrf.mxu0
        %v1026 = vadd.f32 %v465, %v1025
        %1027 = vmatprep.mubr.bf16.mxu0 0
        %1028 = vmatmul.mubr.bf16.gmra.mxu0 %v522
        %v1029 = vpop.f32.mrf.mxu0
        %v1030 = vadd.f32 %v461, %v1029
        %v1031 = vpop.f32.mrf.mxu0
        %v1032 = vadd.f32 %v465, %v1031
        %v1033 = vpop.f32.mrf.mxu0
        %v1034 = vadd.f32 %v461, %v1033
        %v1035 = vpop.f32.mrf.mxu0
        %v1036 = vadd.f32 %v465, %v1035
        %1037 = vmatprep.mubr.bf16.mxu0 0
        %1038 = vmatmul.mubr.bf16.gmra.mxu0 %v523
        %v1039 = vpop.f32.mrf.mxu0
        %v1040 = vadd.f32 %v461, %v1039
        %v1041 = vpop.f32.mrf.mxu0
        %v1042 = vadd.f32 %v465, %v1041
        %v1043 = vpop.f32.mrf.mxu0
        %v1044 = vadd.f32 %v461, %v1043
        %v1045 = vpop.f32.mrf.mxu0
        %v1046 = vadd.f32 %v465, %v1045
        %1047 = vmatprep.mubr.bf16.mxu0 0
        %1048 = vmatmul.mubr.bf16.gmra.mxu0 %v524
        %v1049 = vpop.f32.mrf.mxu0
        %v1050 = vadd.f32 %v461, %v1049
        %v1051 = vpop.f32.mrf.mxu0
        %v1052 = vadd.f32 %v465, %v1051
        %v1053 = vpop.f32.mrf.mxu0
        %v1054 = vadd.f32 %v461, %v1053
        %v1055 = vpop.f32.mrf.mxu0
        %v1056 = vadd.f32 %v465, %v1055
        %1057 = vdwg.mxu0
        %1058 = vmatprep.subr.bf16.mxu0 %v785
        %1059 = vmatpush1.bf16.msra.mxu0 %v784
        %1060 = vmatprep.subr.bf16.mxu0 %v777
        %1061 = vmatpush1.bf16.msra.mxu0 %v776
        %1062 = vmatprep.subr.bf16.mxu0 %v769
        %1063 = vmatpush1.bf16.msra.mxu0 %v768
        %1064 = vmatprep.subr.bf16.mxu0 %v761
        %1065 = vmatpush1.bf16.msra.mxu0 %v760
        %1066 = vmatprep.subr.bf16.mxu0 %v753
        %1067 = vmatpush1.bf16.msra.mxu0 %v752
        %1068 = vmatprep.subr.bf16.mxu0 %v745
        %1069 = vmatpush1.bf16.msra.mxu0 %v744
        %1070 = vmatprep.subr.bf16.mxu0 %v737
        %1071 = vmatpush1.bf16.msra.mxu0 %v736
        %1072 = vmatprep.subr.bf16.mxu0 %v729
        %1073 = vmatpush1.bf16.msra.mxu0 %v728
        %1074 = vmatprep.subr.bf16.mxu0 0
        %1075 = vmatpush2.bf16.msra.mxu0 0
        %1076 = vmatprep.subr.bf16.mxu0 0
        %1077 = vmatpush2.bf16.msra.mxu0 0
        %1078 = vmatprep.subr.bf16.mxu0 0
        %1079 = vmatpush2.bf16.msra.mxu0 0
        %1080 = vmatprep.subr.bf16.mxu0 0
        %1081 = vmatpush2.bf16.msra.mxu0 0
        %1082 = vmatprep.subr.bf16.mxu0 0
        %1083 = vmatpush2.bf16.msra.mxu0 0
        %1084 = vmatprep.subr.bf16.mxu0 0
        %1085 = vmatpush2.bf16.msra.mxu0 0
        %1086 = vmatprep.subr.bf16.mxu0 0
        %1087 = vmatpush2.bf16.msra.mxu0 0
        %1088 = vmatprep.subr.bf16.mxu0 0
        %1089 = vmatpush2.bf16.msra.mxu0 0
        %1090 = vmatprep.mubr.bf16.mxu0 0
        %1091 = vmatmul.mubr.bf16.gmra.mxu0 %v518
        %v1092 = vpop.f32.mrf.mxu0
        %v1093 = vadd.f32 %v469, %v1092
        %v1094 = vpop.f32.mrf.mxu0
        %v1095 = vadd.f32 %v473, %v1094
        %v1096 = vpop.f32.mrf.mxu0
        %v1097 = vadd.f32 %v469, %v1096
        %v1098 = vpop.f32.mrf.mxu0
        %v1099 = vadd.f32 %v473, %v1098
        %1100 = vmatprep.mubr.bf16.mxu0 0
        %1101 = vmatmul.mubr.bf16.gmra.mxu0 %v519
        %v1102 = vpop.f32.mrf.mxu0
        %v1103 = vadd.f32 %v469, %v1102
        %v1104 = vpop.f32.mrf.mxu0
        %v1105 = vadd.f32 %v473, %v1104
        %v1106 = vpop.f32.mrf.mxu0
        %v1107 = vadd.f32 %v469, %v1106
        %v1108 = vpop.f32.mrf.mxu0
        %v1109 = vadd.f32 %v473, %v1108
        %1110 = vmatprep.mubr.bf16.mxu0 0
        %1111 = vmatmul.mubr.bf16.gmra.mxu0 %v520
        %v1112 = vpop.f32.mrf.mxu0
        %v1113 = vadd.f32 %v469, %v1112
        %v1114 = vpop.f32.mrf.mxu0
        %v1115 = vadd.f32 %v473, %v1114
        %v1116 = vpop.f32.mrf.mxu0
        %v1117 = vadd.f32 %v469, %v1116
        %v1118 = vpop.f32.mrf.mxu0
        %v1119 = vadd.f32 %v473, %v1118
        %1120 = vmatprep.mubr.bf16.mxu0 0
        %1121 = vmatmul.mubr.bf16.gmra.mxu0 %v521
        %v1122 = vpop.f32.mrf.mxu0
        %v1123 = vadd.f32 %v469, %v1122
        %v1124 = vpop.f32.mrf.mxu0
        %v1125 = vadd.f32 %v473, %v1124
        %v1126 = vpop.f32.mrf.mxu0
        %v1127 = vadd.f32 %v469, %v1126
        %v1128 = vpop.f32.mrf.mxu0
        %v1129 = vadd.f32 %v473, %v1128
        %1130 = vmatprep.mubr.bf16.mxu0 0
        %1131 = vmatmul.mubr.bf16.gmra.mxu0 %v522
        %v1132 = vpop.f32.mrf.mxu0
        %v1133 = vadd.f32 %v469, %v1132
        %v1134 = vpop.f32.mrf.mxu0
        %v1135 = vadd.f32 %v473, %v1134
        %v1136 = vpop.f32.mrf.mxu0
        %v1137 = vadd.f32 %v469, %v1136
        %v1138 = vpop.f32.mrf.mxu0
        %v1139 = vadd.f32 %v473, %v1138
        %1140 = vmatprep.mubr.bf16.mxu0 0
        %1141 = vmatmul.mubr.bf16.gmra.mxu0 %v523
        %v1142 = vpop.f32.mrf.mxu0
        %v1143 = vadd.f32 %v469, %v1142
        %v1144 = vpop.f32.mrf.mxu0
        %v1145 = vadd.f32 %v473, %v1144
        %v1146 = vpop.f32.mrf.mxu0
        %v1147 = vadd.f32 %v469, %v1146
        %v1148 = vpop.f32.mrf.mxu0
        %v1149 = vadd.f32 %v473, %v1148
        %1150 = vmatprep.mubr.bf16.mxu0 0
        %1151 = vmatmul.mubr.bf16.gmra.mxu0 %v524
        %v1152 = vpop.f32.mrf.mxu0
        %v1153 = vadd.f32 %v469, %v1152
        %v1154 = vpop.f32.mrf.mxu0
        %v1155 = vadd.f32 %v473, %v1154
        %v1156 = vpop.f32.mrf.mxu0
        %v1157 = vadd.f32 %v469, %v1156
        %v1158 = vpop.f32.mrf.mxu0
        %v1159 = vadd.f32 %v473, %v1158
        %1160 = vdwg.mxu0
        %1161 = vmatprep.subr.bf16.mxu0 %v787
        %1162 = vmatpush1.bf16.msra.mxu0 %v786
        %1163 = vmatprep.subr.bf16.mxu0 %v779
        %1164 = vmatpush1.bf16.msra.mxu0 %v778
        %1165 = vmatprep.subr.bf16.mxu0 %v771
        %1166 = vmatpush1.bf16.msra.mxu0 %v770
        %1167 = vmatprep.subr.bf16.mxu0 %v763
        %1168 = vmatpush1.bf16.msra.mxu0 %v762
        %1169 = vmatprep.subr.bf16.mxu0 %v755
        %1170 = vmatpush1.bf16.msra.mxu0 %v754
        %1171 = vmatprep.subr.bf16.mxu0 %v747
        %1172 = vmatpush1.bf16.msra.mxu0 %v746
        %1173 = vmatprep.subr.bf16.mxu0 %v739
        %1174 = vmatpush1.bf16.msra.mxu0 %v738
        %1175 = vmatprep.subr.bf16.mxu0 %v731
        %1176 = vmatpush1.bf16.msra.mxu0 %v730
        %1177 = vmatprep.subr.bf16.mxu0 0
        %1178 = vmatpush2.bf16.msra.mxu0 0
        %1179 = vmatprep.subr.bf16.mxu0 0
        %1180 = vmatpush2.bf16.msra.mxu0 0
        %1181 = vmatprep.subr.bf16.mxu0 0
        %1182 = vmatpush2.bf16.msra.mxu0 0
        %1183 = vmatprep.subr.bf16.mxu0 0
        %1184 = vmatpush2.bf16.msra.mxu0 0
        %1185 = vmatprep.subr.bf16.mxu0 0
        %1186 = vmatpush2.bf16.msra.mxu0 0
        %1187 = vmatprep.subr.bf16.mxu0 0
        %1188 = vmatpush2.bf16.msra.mxu0 0
        %1189 = vmatprep.subr.bf16.mxu0 0
        %1190 = vmatpush2.bf16.msra.mxu0 0
        %1191 = vmatprep.subr.bf16.mxu0 0
        %1192 = vmatpush2.bf16.msra.mxu0 0
        %1193 = vmatprep.mubr.bf16.mxu0 0
        %1194 = vmatmul.mubr.bf16.gmra.mxu0 %v518
        %v1195 = vpop.f32.mrf.mxu0
        %v1196 = vadd.f32 %v477, %v1195
        %v1197 = vpop.f32.mrf.mxu0
        %v1198 = vadd.f32 %v481, %v1197
        %v1199 = vpop.f32.mrf.mxu0
        %v1200 = vadd.f32 %v477, %v1199
        %v1201 = vpop.f32.mrf.mxu0
        %v1202 = vadd.f32 %v481, %v1201
        %1203 = vmatprep.mubr.bf16.mxu0 0
        %1204 = vmatmul.mubr.bf16.gmra.mxu0 %v519
        %v1205 = vpop.f32.mrf.mxu0
        %v1206 = vadd.f32 %v477, %v1205
        %v1207 = vpop.f32.mrf.mxu0
        %v1208 = vadd.f32 %v481, %v1207
        %v1209 = vpop.f32.mrf.mxu0
        %v1210 = vadd.f32 %v477, %v1209
        %v1211 = vpop.f32.mrf.mxu0
        %v1212 = vadd.f32 %v481, %v1211
        %1213 = vmatprep.mubr.bf16.mxu0 0
        %1214 = vmatmul.mubr.bf16.gmra.mxu0 %v520
        %v1215 = vpop.f32.mrf.mxu0
        %v1216 = vadd.f32 %v477, %v1215
        %v1217 = vpop.f32.mrf.mxu0
        %v1218 = vadd.f32 %v481, %v1217
        %v1219 = vpop.f32.mrf.mxu0
        %v1220 = vadd.f32 %v477, %v1219
        %v1221 = vpop.f32.mrf.mxu0
        %v1222 = vadd.f32 %v481, %v1221
        %1223 = vmatprep.mubr.bf16.mxu0 0
        %1224 = vmatmul.mubr.bf16.gmra.mxu0 %v521
        %v1225 = vpop.f32.mrf.mxu0
        %v1226 = vadd.f32 %v477, %v1225
        %v1227 = vpop.f32.mrf.mxu0
        %v1228 = vadd.f32 %v481, %v1227
        %v1229 = vpop.f32.mrf.mxu0
        %v1230 = vadd.f32 %v477, %v1229
        %v1231 = vpop.f32.mrf.mxu0
        %v1232 = vadd.f32 %v481, %v1231
        %1233 = vmatprep.mubr.bf16.mxu0 0
        %1234 = vmatmul.mubr.bf16.gmra.mxu0 %v522
        %v1235 = vpop.f32.mrf.mxu0
        %v1236 = vadd.f32 %v477, %v1235
        %v1237 = vpop.f32.mrf.mxu0
        %v1238 = vadd.f32 %v481, %v1237
        %v1239 = vpop.f32.mrf.mxu0
        %v1240 = vadd.f32 %v477, %v1239
        %v1241 = vpop.f32.mrf.mxu0
        %v1242 = vadd.f32 %v481, %v1241
        %1243 = vmatprep.mubr.bf16.mxu0 0
        %1244 = vmatmul.mubr.bf16.gmra.mxu0 %v523
        %v1245 = vpop.f32.mrf.mxu0
        %v1246 = vadd.f32 %v477, %v1245
        %v1247 = vpop.f32.mrf.mxu0
        %v1248 = vadd.f32 %v481, %v1247
        %v1249 = vpop.f32.mrf.mxu0
        %v1250 = vadd.f32 %v477, %v1249
        %v1251 = vpop.f32.mrf.mxu0
        %v1252 = vadd.f32 %v481, %v1251
        %1253 = vmatprep.mubr.bf16.mxu0 0
        %1254 = vmatmul.mubr.bf16.gmra.mxu0 %v524
        %v1255 = vpop.f32.mrf.mxu0
        %v1256 = vadd.f32 %v477, %v1255
        %v1257 = vpop.f32.mrf.mxu0
        %v1258 = vadd.f32 %v481, %v1257
        %v1259 = vpop.f32.mrf.mxu0
        %v1260 = vadd.f32 %v477, %v1259
        %v1261 = vpop.f32.mrf.mxu0
        %v1262 = vadd.f32 %v481, %v1261
        %1263 = vdwg.mxu0
        %v1264 = vmax.f32 %v887, 0.0
        %v1265 = vmax.f32 %v889, 0.0
        %v1266 = vmax.f32 %v990, 0.0
        %v1267 = vmax.f32 %v992, 0.0
        %v1268 = vmax.f32 %v1093, 0.0
        %v1269 = vmax.f32 %v1095, 0.0
        %v1270 = vmax.f32 %v1196, 0.0
        %v1271 = vmax.f32 %v1198, 0.0
        %v1272 = vmax.f32 %v891, 0.0
        %v1273 = vmax.f32 %v893, 0.0
        %v1274 = vmax.f32 %v994, 0.0
        %v1275 = vmax.f32 %v996, 0.0
        %v1276 = vmax.f32 %v1097, 0.0
        %v1277 = vmax.f32 %v1099, 0.0
        %v1278 = vmax.f32 %v1200, 0.0
        %v1279 = vmax.f32 %v1202, 0.0
        %v1280 = vmax.f32 %v897, 0.0
        %v1281 = vmax.f32 %v899, 0.0
        %v1282 = vmax.f32 %v1000, 0.0
        %v1283 = vmax.f32 %v1002, 0.0
        %v1284 = vmax.f32 %v1103, 0.0
        %v1285 = vmax.f32 %v1105, 0.0
        %v1286 = vmax.f32 %v1206, 0.0
        %v1287 = vmax.f32 %v1208, 0.0
        %v1288 = vmax.f32 %v901, 0.0
        %v1289 = vmax.f32 %v903, 0.0
        %v1290 = vmax.f32 %v1004, 0.0
        %v1291 = vmax.f32 %v1006, 0.0
        %v1292 = vmax.f32 %v1107, 0.0
        %v1293 = vmax.f32 %v1109, 0.0
        %v1294 = vmax.f32 %v1210, 0.0
        %v1295 = vmax.f32 %v1212, 0.0
        %v1296 = vmax.f32 %v907, 0.0
        %v1297 = vmax.f32 %v909, 0.0
        %v1298 = vmax.f32 %v1010, 0.0
        %v1299 = vmax.f32 %v1012, 0.0
        %v1300 = vmax.f32 %v1113, 0.0
        %v1301 = vmax.f32 %v1115, 0.0
        %v1302 = vmax.f32 %v1216, 0.0
        %v1303 = vmax.f32 %v1218, 0.0
        %v1304 = vmax.f32 %v911, 0.0
        %v1305 = vmax.f32 %v913, 0.0
        %v1306 = vmax.f32 %v1014, 0.0
        %v1307 = vmax.f32 %v1016, 0.0
        %v1308 = vmax.f32 %v1117, 0.0
        %v1309 = vmax.f32 %v1119, 0.0
        %v1310 = vmax.f32 %v1220, 0.0
        %v1311 = vmax.f32 %v1222, 0.0
        %v1312 = vmax.f32 %v917, 0.0
        %v1313 = vmax.f32 %v919, 0.0
        %v1314 = vmax.f32 %v1020, 0.0
        %v1315 = vmax.f32 %v1022, 0.0
        %v1316 = vmax.f32 %v1123, 0.0
        %v1317 = vmax.f32 %v1125, 0.0
        %v1318 = vmax.f32 %v1226, 0.0
        %v1319 = vmax.f32 %v1228, 0.0
        %v1320 = vmax.f32 %v921, 0.0
        %v1321 = vmax.f32 %v923, 0.0
        %v1322 = vmax.f32 %v1024, 0.0
        %v1323 = vmax.f32 %v1026, 0.0
        %v1324 = vmax.f32 %v1127, 0.0
        %v1325 = vmax.f32 %v1129, 0.0
        %v1326 = vmax.f32 %v1230, 0.0
        %v1327 = vmax.f32 %v1232, 0.0
        %v1328 = vmax.f32 %v927, 0.0
        %v1329 = vmax.f32 %v929, 0.0
        %v1330 = vmax.f32 %v1030, 0.0
        %v1331 = vmax.f32 %v1032, 0.0
        %v1332 = vmax.f32 %v1133, 0.0
        %v1333 = vmax.f32 %v1135, 0.0
        %v1334 = vmax.f32 %v1236, 0.0
        %v1335 = vmax.f32 %v1238, 0.0
        %v1336 = vmax.f32 %v931, 0.0
        %v1337 = vmax.f32 %v933, 0.0
        %v1338 = vmax.f32 %v1034, 0.0
        %v1339 = vmax.f32 %v1036, 0.0
        %v1340 = vmax.f32 %v1137, 0.0
        %v1341 = vmax.f32 %v1139, 0.0
        %v1342 = vmax.f32 %v1240, 0.0
        %v1343 = vmax.f32 %v1242, 0.0
        %v1344 = vmax.f32 %v937, 0.0
        %v1345 = vmax.f32 %v939, 0.0
        %v1346 = vmax.f32 %v1040, 0.0
        %v1347 = vmax.f32 %v1042, 0.0
        %v1348 = vmax.f32 %v1143, 0.0
        %v1349 = vmax.f32 %v1145, 0.0
        %v1350 = vmax.f32 %v1246, 0.0
        %v1351 = vmax.f32 %v1248, 0.0
        %v1352 = vmax.f32 %v941, 0.0
        %v1353 = vmax.f32 %v943, 0.0
        %v1354 = vmax.f32 %v1044, 0.0
        %v1355 = vmax.f32 %v1046, 0.0
        %v1356 = vmax.f32 %v1147, 0.0
        %v1357 = vmax.f32 %v1149, 0.0
        %v1358 = vmax.f32 %v1250, 0.0
        %v1359 = vmax.f32 %v1252, 0.0
        %v1360 = vmax.f32 %v947, 0.0
        %v1361 = vmax.f32 %v949, 0.0
        %v1362 = vmax.f32 %v1050, 0.0
        %v1363 = vmax.f32 %v1052, 0.0
        %v1364 = vmax.f32 %v1153, 0.0
        %v1365 = vmax.f32 %v1155, 0.0
        %v1366 = vmax.f32 %v1256, 0.0
        %v1367 = vmax.f32 %v1258, 0.0
        %v1368 = vmax.f32 %v951, 0.0
        %v1369 = vmax.f32 %v953, 0.0
        %v1370 = vmax.f32 %v1054, 0.0
        %v1371 = vmax.f32 %v1056, 0.0
        %v1372 = vmax.f32 %v1157, 0.0
        %v1373 = vmax.f32 %v1159, 0.0
        %v1374 = vmax.f32 %v1260, 0.0
        %v1375 = vmax.f32 %v1262, 0.0
        %v1376 = vpack.c.bf16 %v1272, %v1264
        %v1377 = vpack.c.bf16 %v1273, %v1265
        %v1378 = vpack.c.bf16 %v1274, %v1266
        %v1379 = vpack.c.bf16 %v1275, %v1267
        %v1380 = vpack.c.bf16 %v1276, %v1268
        %v1381 = vpack.c.bf16 %v1277, %v1269
        %v1382 = vpack.c.bf16 %v1278, %v1270
        %v1383 = vpack.c.bf16 %v1279, %v1271
        %v1384 = vpack.c.bf16 %v1288, %v1280
        %v1385 = vpack.c.bf16 %v1289, %v1281
        %v1386 = vpack.c.bf16 %v1290, %v1282
        %v1387 = vpack.c.bf16 %v1291, %v1283
        %v1388 = vpack.c.bf16 %v1292, %v1284
        %v1389 = vpack.c.bf16 %v1293, %v1285
        %v1390 = vpack.c.bf16 %v1294, %v1286
        %v1391 = vpack.c.bf16 %v1295, %v1287
        %v1392 = vpack.c.bf16 %v1304, %v1296
        %v1393 = vpack.c.bf16 %v1305, %v1297
        %v1394 = vpack.c.bf16 %v1306, %v1298
        %v1395 = vpack.c.bf16 %v1307, %v1299
        %v1396 = vpack.c.bf16 %v1308, %v1300
        %v1397 = vpack.c.bf16 %v1309, %v1301
        %v1398 = vpack.c.bf16 %v1310, %v1302
        %v1399 = vpack.c.bf16 %v1311, %v1303
        %v1400 = vpack.c.bf16 %v1320, %v1312
        %v1401 = vpack.c.bf16 %v1321, %v1313
        %v1402 = vpack.c.bf16 %v1322, %v1314
        %v1403 = vpack.c.bf16 %v1323, %v1315
        %v1404 = vpack.c.bf16 %v1324, %v1316
        %v1405 = vpack.c.bf16 %v1325, %v1317
        %v1406 = vpack.c.bf16 %v1326, %v1318
        %v1407 = vpack.c.bf16 %v1327, %v1319
        %v1408 = vpack.c.bf16 %v1336, %v1328
        %v1409 = vpack.c.bf16 %v1337, %v1329
        %v1410 = vpack.c.bf16 %v1338, %v1330
        %v1411 = vpack.c.bf16 %v1339, %v1331
        %v1412 = vpack.c.bf16 %v1340, %v1332
        %v1413 = vpack.c.bf16 %v1341, %v1333
        %v1414 = vpack.c.bf16 %v1342, %v1334
        %v1415 = vpack.c.bf16 %v1343, %v1335
        %v1416 = vpack.c.bf16 %v1352, %v1344
        %v1417 = vpack.c.bf16 %v1353, %v1345
        %v1418 = vpack.c.bf16 %v1354, %v1346
        %v1419 = vpack.c.bf16 %v1355, %v1347
        %v1420 = vpack.c.bf16 %v1356, %v1348
        %v1421 = vpack.c.bf16 %v1357, %v1349
        %v1422 = vpack.c.bf16 %v1358, %v1350
        %v1423 = vpack.c.bf16 %v1359, %v1351
        %v1424 = vpack.c.bf16 %v1368, %v1360
        %v1425 = vpack.c.bf16 %v1369, %v1361
        %v1426 = vpack.c.bf16 %v1370, %v1362
        %v1427 = vpack.c.bf16 %v1371, %v1363
        %v1428 = vpack.c.bf16 %v1372, %v1364
        %v1429 = vpack.c.bf16 %v1373, %v1365
        %v1430 = vpack.c.bf16 %v1374, %v1366
        %v1431 = vpack.c.bf16 %v1375, %v1367
        %v1432 = vld [vmem:[#allocation8] sm:$0xff]
        %v1433 = vld [vmem:[#allocation8 + $0x8] sm:$0xff]
        %v1434 = vld [vmem:[#allocation8 + $0x10] sm:$0xff]
        %v1435 = vld [vmem:[#allocation8 + $0x18] sm:$0xff]
        %v1436 = vld [vmem:[#allocation8 + $0x20] sm:$0xff]
        %v1437 = vld [vmem:[#allocation8 + $0x28] sm:$0xff]
        %v1438 = vld [vmem:[#allocation8 + $0x30] sm:$0xff]
        %v1439 = vld [vmem:[#allocation8 + $0x38] sm:$0xff]
        %v1440 = vld [vmem:[#allocation8 + $0x40] sm:$0xff]
        %v1441 = vld [vmem:[#allocation8 + $0x48] sm:$0xff]
        %v1442 = vld [vmem:[#allocation8 + $0x50] sm:$0xff]
        %v1443 = vld [vmem:[#allocation8 + $0x58] sm:$0xff]
        %v1444 = vld [vmem:[#allocation8 + $0x60] sm:$0xff]
        %v1445 = vld [vmem:[#allocation8 + $0x68] sm:$0xff]
        %v1446 = vld [vmem:[#allocation8 + $0x70] sm:$0xff]
        %v1447 = vld [vmem:[#allocation8 + $0x78] sm:$0xff]
        %v1448 = vld [vmem:[#allocation8 + $0x80] sm:$0xff]
        %v1449 = vld [vmem:[#allocation8 + $0x88] sm:$0xff]
        %v1450 = vld [vmem:[#allocation8 + $0x90] sm:$0xff]
        %v1451 = vld [vmem:[#allocation8 + $0x98] sm:$0xff]
        %v1452 = vld [vmem:[#allocation8 + $0xa0] sm:$0xff]
        %v1453 = vld [vmem:[#allocation8 + $0xa8] sm:$0xff]
        %v1454 = vld [vmem:[#allocation8 + $0xb0] sm:$0xff]
        %v1455 = vld [vmem:[#allocation8 + $0xb8] sm:$0xff]
        %v1456 = vld [vmem:[#allocation8 + $0xc0] sm:$0xff]
        %v1457 = vld [vmem:[#allocation8 + $0xc8] sm:$0xff]
        %v1458 = vld [vmem:[#allocation8 + $0xd0] sm:$0xff]
        %v1459 = vld [vmem:[#allocation8 + $0xd8] sm:$0xff]
        %v1460 = vld [vmem:[#allocation8 + $0xe0] sm:$0xff]
        %v1461 = vld [vmem:[#allocation8 + $0xe8] sm:$0xff]
        %v1462 = vld [vmem:[#allocation8 + $0xf0] sm:$0xff]
        %v1463 = vld [vmem:[#allocation8 + $0xf8] sm:$0xff]
        %v1464 = vld [vmem:[#allocation8 + $0x100] sm:$0xff]
        %v1465 = vld [vmem:[#allocation8 + $0x108] sm:$0xff]
        %v1466 = vld [vmem:[#allocation8 + $0x110] sm:$0xff]
        %v1467 = vld [vmem:[#allocation8 + $0x118] sm:$0xff]
        %v1468 = vld [vmem:[#allocation8 + $0x120] sm:$0xff]
        %v1469 = vld [vmem:[#allocation8 + $0x128] sm:$0xff]
        %v1470 = vld [vmem:[#allocation8 + $0x130] sm:$0xff]
        %v1471 = vld [vmem:[#allocation8 + $0x138] sm:$0xff]
        %v1472 = vld [vmem:[#allocation8 + $0x140] sm:$0xff]
        %v1473 = vld [vmem:[#allocation8 + $0x148] sm:$0xff]
        %v1474 = vld [vmem:[#allocation8 + $0x150] sm:$0xff]
        %v1475 = vld [vmem:[#allocation8 + $0x158] sm:$0xff]
        %v1476 = vld [vmem:[#allocation8 + $0x160] sm:$0xff]
        %v1477 = vld [vmem:[#allocation8 + $0x168] sm:$0xff]
        %v1478 = vld [vmem:[#allocation8 + $0x170] sm:$0xff]
        %v1479 = vld [vmem:[#allocation8 + $0x178] sm:$0xff]
        %v1480 = vld [vmem:[#allocation8 + $0x180] sm:$0xff]
        %v1481 = vld [vmem:[#allocation8 + $0x188] sm:$0xff]
        %v1482 = vld [vmem:[#allocation8 + $0x190] sm:$0xff]
        %v1483 = vld [vmem:[#allocation8 + $0x198] sm:$0xff]
        %v1484 = vld [vmem:[#allocation8 + $0x1a0] sm:$0xff]
        %v1485 = vld [vmem:[#allocation8 + $0x1a8] sm:$0xff]
        %v1486 = vld [vmem:[#allocation8 + $0x1b0] sm:$0xff]
        %v1487 = vld [vmem:[#allocation8 + $0x1b8] sm:$0xff]
        %v1488 = vld [vmem:[#allocation8 + $0x1c0] sm:$0xff]
        %v1489 = vld [vmem:[#allocation8 + $0x1c8] sm:$0xff]
        %v1490 = vld [vmem:[#allocation8 + $0x1d0] sm:$0xff]
        %v1491 = vld [vmem:[#allocation8 + $0x1d8] sm:$0xff]
        %v1492 = vld [vmem:[#allocation8 + $0x1e0] sm:$0xff]
        %v1493 = vld [vmem:[#allocation8 + $0x1e8] sm:$0xff]
        %v1494 = vld [vmem:[#allocation8 + $0x1f0] sm:$0xff]
        %v1495 = vld [vmem:[#allocation8 + $0x1f8] sm:$0xff]
        %v1496 = vld [vmem:[#allocation8 + $0x200] sm:$0xff]
        %v1497 = vld [vmem:[#allocation8 + $0x208] sm:$0xff]
        %v1498 = vld [vmem:[#allocation8 + $0x210] sm:$0xff]
        %v1499 = vld [vmem:[#allocation8 + $0x218] sm:$0xff]
        %v1500 = vld [vmem:[#allocation8 + $0x220] sm:$0xff]
        %v1501 = vld [vmem:[#allocation8 + $0x228] sm:$0xff]
        %v1502 = vld [vmem:[#allocation8 + $0x230] sm:$0xff]
        %v1503 = vld [vmem:[#allocation8 + $0x238] sm:$0xff]
        %v1504 = vld [vmem:[#allocation8 + $0x240] sm:$0xff]
        %v1505 = vld [vmem:[#allocation8 + $0x248] sm:$0xff]
        %v1506 = vld [vmem:[#allocation8 + $0x250] sm:$0xff]
        %v1507 = vld [vmem:[#allocation8 + $0x258] sm:$0xff]
        %v1508 = vld [vmem:[#allocation8 + $0x260] sm:$0xff]
        %v1509 = vld [vmem:[#allocation8 + $0x268] sm:$0xff]
        %v1510 = vld [vmem:[#allocation8 + $0x270] sm:$0xff]
        %v1511 = vld [vmem:[#allocation8 + $0x278] sm:$0xff]
        %v1512 = vld [vmem:[#allocation8 + $0x280] sm:$0xff]
        %v1513 = vld [vmem:[#allocation8 + $0x288] sm:$0xff]
        %v1514 = vld [vmem:[#allocation8 + $0x290] sm:$0xff]
        %v1515 = vld [vmem:[#allocation8 + $0x298] sm:$0xff]
        %v1516 = vld [vmem:[#allocation8 + $0x2a0] sm:$0xff]
        %v1517 = vld [vmem:[#allocation8 + $0x2a8] sm:$0xff]
        %v1518 = vld [vmem:[#allocation8 + $0x2b0] sm:$0xff]
        %v1519 = vld [vmem:[#allocation8 + $0x2b8] sm:$0xff]
        %v1520 = vld [vmem:[#allocation8 + $0x2c0] sm:$0xff]
        %v1521 = vld [vmem:[#allocation8 + $0x2c8] sm:$0xff]
        %v1522 = vld [vmem:[#allocation8 + $0x2d0] sm:$0xff]
        %v1523 = vld [vmem:[#allocation8 + $0x2d8] sm:$0xff]
        %v1524 = vld [vmem:[#allocation8 + $0x2e0] sm:$0xff]
        %v1525 = vld [vmem:[#allocation8 + $0x2e8] sm:$0xff]
        %v1526 = vld [vmem:[#allocation8 + $0x2f0] sm:$0xff]
        %v1527 = vld [vmem:[#allocation8 + $0x2f8] sm:$0xff]
        %v1528 = vld [vmem:[#allocation8 + $0x300] sm:$0xff]
        %v1529 = vld [vmem:[#allocation8 + $0x308] sm:$0xff]
        %v1530 = vld [vmem:[#allocation8 + $0x310] sm:$0xff]
        %v1531 = vld [vmem:[#allocation8 + $0x318] sm:$0xff]
        %v1532 = vld [vmem:[#allocation8 + $0x320] sm:$0xff]
        %v1533 = vld [vmem:[#allocation8 + $0x328] sm:$0xff]
        %v1534 = vld [vmem:[#allocation8 + $0x330] sm:$0xff]
        %v1535 = vld [vmem:[#allocation8 + $0x338] sm:$0xff]
        %v1536 = vld [vmem:[#allocation8 + $0x340] sm:$0xff]
        %v1537 = vld [vmem:[#allocation8 + $0x348] sm:$0xff]
        %v1538 = vld [vmem:[#allocation8 + $0x350] sm:$0xff]
        %v1539 = vld [vmem:[#allocation8 + $0x358] sm:$0xff]
        %v1540 = vld [vmem:[#allocation8 + $0x360] sm:$0xff]
        %v1541 = vld [vmem:[#allocation8 + $0x368] sm:$0xff]
        %v1542 = vld [vmem:[#allocation8 + $0x370] sm:$0xff]
        %v1543 = vld [vmem:[#allocation8 + $0x378] sm:$0xff]
        %v1544 = vld [vmem:[#allocation8 + $0x380] sm:$0xff]
        %v1545 = vld [vmem:[#allocation8 + $0x388] sm:$0xff]
        %v1546 = vld [vmem:[#allocation8 + $0x390] sm:$0xff]
        %v1547 = vld [vmem:[#allocation8 + $0x398] sm:$0xff]
        %v1548 = vld [vmem:[#allocation8 + $0x3a0] sm:$0xff]
        %v1549 = vld [vmem:[#allocation8 + $0x3a8] sm:$0xff]
        %v1550 = vld [vmem:[#allocation8 + $0x3b0] sm:$0xff]
        %v1551 = vld [vmem:[#allocation8 + $0x3b8] sm:$0xff]
        %v1552 = vld [vmem:[#allocation8 + $0x3c0] sm:$0xff]
        %v1553 = vld [vmem:[#allocation8 + $0x3c8] sm:$0xff]
        %v1554 = vld [vmem:[#allocation8 + $0x3d0] sm:$0xff]
        %v1555 = vld [vmem:[#allocation8 + $0x3d8] sm:$0xff]
        %v1556 = vld [vmem:[#allocation8 + $0x3e0] sm:$0xff]
        %v1557 = vld [vmem:[#allocation8 + $0x3e8] sm:$0xff]
        %v1558 = vld [vmem:[#allocation8 + $0x3f0] sm:$0xff]
        %v1559 = vld [vmem:[#allocation8 + $0x3f8] sm:$0xff]
        %v1560 = vld [vmem:[%s4] sm:$0x3]
        %v1562 = vlaneseq
        %v1563 = vshrl.u32 %v1562, 7
        %v1564 = vsub.s32 0, %v1563
        %v1565 = vrot.slane %v1560, %v1564
        %v1566 = vlaneseq
        %v1567 = vshrl.u32 %v1566, 7
        %v1568 = vsub.s32 1, %v1567
        %v1569 = vrot.slane %v1560, %v1568
        %v1700 = vunpack.c.l.b16 %v1432
        %v1701 = vunpack.c.h.b16 %v1432
        %v1702 = vunpack.c.l.b16 %v1433
        %v1703 = vunpack.c.h.b16 %v1433
        %v1704 = vunpack.c.l.b16 %v1434
        %v1705 = vunpack.c.h.b16 %v1434
        %v1706 = vunpack.c.l.b16 %v1435
        %v1707 = vunpack.c.h.b16 %v1435
        %v1708 = vunpack.c.l.b16 %v1436
        %v1709 = vunpack.c.h.b16 %v1436
        %v1710 = vunpack.c.l.b16 %v1437
        %v1711 = vunpack.c.h.b16 %v1437
        %v1712 = vunpack.c.l.b16 %v1438
        %v1713 = vunpack.c.h.b16 %v1438
        %v1714 = vunpack.c.l.b16 %v1439
        %v1715 = vunpack.c.h.b16 %v1439
        %v1716 = vunpack.c.l.b16 %v1440
        %v1717 = vunpack.c.h.b16 %v1440
        %v1718 = vunpack.c.l.b16 %v1441
        %v1719 = vunpack.c.h.b16 %v1441
        %v1720 = vunpack.c.l.b16 %v1442
        %v1721 = vunpack.c.h.b16 %v1442
        %v1722 = vunpack.c.l.b16 %v1443
        %v1723 = vunpack.c.h.b16 %v1443
        %v1724 = vunpack.c.l.b16 %v1444
        %v1725 = vunpack.c.h.b16 %v1444
        %v1726 = vunpack.c.l.b16 %v1445
        %v1727 = vunpack.c.h.b16 %v1445
        %v1728 = vunpack.c.l.b16 %v1446
        %v1729 = vunpack.c.h.b16 %v1446
        %v1730 = vunpack.c.l.b16 %v1447
        %v1731 = vunpack.c.h.b16 %v1447
        %v1732 = vunpack.c.l.b16 %v1448
        %v1733 = vunpack.c.h.b16 %v1448
        %v1734 = vunpack.c.l.b16 %v1449
        %v1735 = vunpack.c.h.b16 %v1449
        %v1736 = vunpack.c.l.b16 %v1450
        %v1737 = vunpack.c.h.b16 %v1450
        %v1738 = vunpack.c.l.b16 %v1451
        %v1739 = vunpack.c.h.b16 %v1451
        %v1740 = vunpack.c.l.b16 %v1452
        %v1741 = vunpack.c.h.b16 %v1452
        %v1742 = vunpack.c.l.b16 %v1453
        %v1743 = vunpack.c.h.b16 %v1453
        %v1744 = vunpack.c.l.b16 %v1454
        %v1745 = vunpack.c.h.b16 %v1454
        %v1746 = vunpack.c.l.b16 %v1455
        %v1747 = vunpack.c.h.b16 %v1455
        %v1748 = vunpack.c.l.b16 %v1456
        %v1749 = vunpack.c.h.b16 %v1456
        %v1750 = vunpack.c.l.b16 %v1457
        %v1751 = vunpack.c.h.b16 %v1457
        %v1752 = vunpack.c.l.b16 %v1458
        %v1753 = vunpack.c.h.b16 %v1458
        %v1754 = vunpack.c.l.b16 %v1459
        %v1755 = vunpack.c.h.b16 %v1459
        %v1756 = vunpack.c.l.b16 %v1460
        %v1757 = vunpack.c.h.b16 %v1460
        %v1758 = vunpack.c.l.b16 %v1461
        %v1759 = vunpack.c.h.b16 %v1461
        %v1760 = vunpack.c.l.b16 %v1462
        %v1761 = vunpack.c.h.b16 %v1462
        %v1762 = vunpack.c.l.b16 %v1463
        %v1763 = vunpack.c.h.b16 %v1463
        %v1764 = vunpack.c.l.b16 %v1464
        %v1765 = vunpack.c.h.b16 %v1464
        %v1766 = vunpack.c.l.b16 %v1465
        %v1767 = vunpack.c.h.b16 %v1465
        %v1768 = vunpack.c.l.b16 %v1466
        %v1769 = vunpack.c.h.b16 %v1466
        %v1770 = vunpack.c.l.b16 %v1467
        %v1771 = vunpack.c.h.b16 %v1467
        %v1772 = vunpack.c.l.b16 %v1468
        %v1773 = vunpack.c.h.b16 %v1468
        %v1774 = vunpack.c.l.b16 %v1469
        %v1775 = vunpack.c.h.b16 %v1469
        %v1776 = vunpack.c.l.b16 %v1470
        %v1777 = vunpack.c.h.b16 %v1470
        %v1778 = vunpack.c.l.b16 %v1471
        %v1779 = vunpack.c.h.b16 %v1471
        %v1780 = vunpack.c.l.b16 %v1472
        %v1781 = vunpack.c.h.b16 %v1472
        %v1782 = vunpack.c.l.b16 %v1473
        %v1783 = vunpack.c.h.b16 %v1473
        %v1784 = vunpack.c.l.b16 %v1474
        %v1785 = vunpack.c.h.b16 %v1474
        %v1786 = vunpack.c.l.b16 %v1475
        %v1787 = vunpack.c.h.b16 %v1475
        %v1788 = vunpack.c.l.b16 %v1476
        %v1789 = vunpack.c.h.b16 %v1476
        %v1790 = vunpack.c.l.b16 %v1477
        %v1791 = vunpack.c.h.b16 %v1477
        %v1792 = vunpack.c.l.b16 %v1478
        %v1793 = vunpack.c.h.b16 %v1478
        %v1794 = vunpack.c.l.b16 %v1479
        %v1795 = vunpack.c.h.b16 %v1479
        %v1796 = vunpack.c.l.b16 %v1480
        %v1797 = vunpack.c.h.b16 %v1480
        %v1798 = vunpack.c.l.b16 %v1481
        %v1799 = vunpack.c.h.b16 %v1481
        %v1800 = vunpack.c.l.b16 %v1482
        %v1801 = vunpack.c.h.b16 %v1482
        %v1802 = vunpack.c.l.b16 %v1483
        %v1803 = vunpack.c.h.b16 %v1483
        %v1804 = vunpack.c.l.b16 %v1484
        %v1805 = vunpack.c.h.b16 %v1484
        %v1806 = vunpack.c.l.b16 %v1485
        %v1807 = vunpack.c.h.b16 %v1485
        %v1808 = vunpack.c.l.b16 %v1486
        %v1809 = vunpack.c.h.b16 %v1486
        %v1810 = vunpack.c.l.b16 %v1487
        %v1811 = vunpack.c.h.b16 %v1487
        %v1812 = vunpack.c.l.b16 %v1488
        %v1813 = vunpack.c.h.b16 %v1488
        %v1814 = vunpack.c.l.b16 %v1489
        %v1815 = vunpack.c.h.b16 %v1489
        %v1816 = vunpack.c.l.b16 %v1490
        %v1817 = vunpack.c.h.b16 %v1490
        %v1818 = vunpack.c.l.b16 %v1491
        %v1819 = vunpack.c.h.b16 %v1491
        %v1820 = vunpack.c.l.b16 %v1492
        %v1821 = vunpack.c.h.b16 %v1492
        %v1822 = vunpack.c.l.b16 %v1493
        %v1823 = vunpack.c.h.b16 %v1493
        %v1824 = vunpack.c.l.b16 %v1494
        %v1825 = vunpack.c.h.b16 %v1494
        %v1826 = vunpack.c.l.b16 %v1495
        %v1827 = vunpack.c.h.b16 %v1495
        %v1828 = vunpack.c.l.b16 %v1496
        %v1829 = vunpack.c.h.b16 %v1496
        %v1830 = vunpack.c.l.b16 %v1497
        %v1831 = vunpack.c.h.b16 %v1497
        %v1832 = vunpack.c.l.b16 %v1498
        %v1833 = vunpack.c.h.b16 %v1498
        %v1834 = vunpack.c.l.b16 %v1499
        %v1835 = vunpack.c.h.b16 %v1499
        %v1836 = vunpack.c.l.b16 %v1500
        %v1837 = vunpack.c.h.b16 %v1500
        %v1838 = vunpack.c.l.b16 %v1501
        %v1839 = vunpack.c.h.b16 %v1501
        %v1840 = vunpack.c.l.b16 %v1502
        %v1841 = vunpack.c.h.b16 %v1502
        %v1842 = vunpack.c.l.b16 %v1503
        %v1843 = vunpack.c.h.b16 %v1503
        %v1844 = vunpack.c.l.b16 %v1504
        %v1845 = vunpack.c.h.b16 %v1504
        %v1846 = vunpack.c.l.b16 %v1505
        %v1847 = vunpack.c.h.b16 %v1505
        %v1848 = vunpack.c.l.b16 %v1506
        %v1849 = vunpack.c.h.b16 %v1506
        %v1850 = vunpack.c.l.b16 %v1507
        %v1851 = vunpack.c.h.b16 %v1507
        %v1852 = vunpack.c.l.b16 %v1508
        %v1853 = vunpack.c.h.b16 %v1508
        %v1854 = vunpack.c.l.b16 %v1509
        %v1855 = vunpack.c.h.b16 %v1509
        %v1856 = vunpack.c.l.b16 %v1510
        %v1857 = vunpack.c.h.b16 %v1510
        %v1858 = vunpack.c.l.b16 %v1511
        %v1859 = vunpack.c.h.b16 %v1511
        %v1860 = vunpack.c.l.b16 %v1512
        %v1861 = vunpack.c.h.b16 %v1512
        %v1862 = vunpack.c.l.b16 %v1513
        %v1863 = vunpack.c.h.b16 %v1513
        %v1864 = vunpack.c.l.b16 %v1514
        %v1865 = vunpack.c.h.b16 %v1514
        %v1866 = vunpack.c.l.b16 %v1515
        %v1867 = vunpack.c.h.b16 %v1515
        %v1868 = vunpack.c.l.b16 %v1516
        %v1869 = vunpack.c.h.b16 %v1516
        %v1870 = vunpack.c.l.b16 %v1517
        %v1871 = vunpack.c.h.b16 %v1517
        %v1872 = vunpack.c.l.b16 %v1518
        %v1873 = vunpack.c.h.b16 %v1518
        %v1874 = vunpack.c.l.b16 %v1519
        %v1875 = vunpack.c.h.b16 %v1519
        %v1876 = vunpack.c.l.b16 %v1520
        %v1877 = vunpack.c.h.b16 %v1520
        %v1878 = vunpack.c.l.b16 %v1521
        %v1879 = vunpack.c.h.b16 %v1521
        %v1880 = vunpack.c.l.b16 %v1522
        %v1881 = vunpack.c.h.b16 %v1522
        %v1882 = vunpack.c.l.b16 %v1523
        %v1883 = vunpack.c.h.b16 %v1523
        %v1884 = vunpack.c.l.b16 %v1524
        %v1885 = vunpack.c.h.b16 %v1524
        %v1886 = vunpack.c.l.b16 %v1525
        %v1887 = vunpack.c.h.b16 %v1525
        %v1888 = vunpack.c.l.b16 %v1526
        %v1889 = vunpack.c.h.b16 %v1526
        %v1890 = vunpack.c.l.b16 %v1527
        %v1891 = vunpack.c.h.b16 %v1527
        %v1892 = vunpack.c.l.b16 %v1528
        %v1893 = vunpack.c.h.b16 %v1528
        %v1894 = vunpack.c.l.b16 %v1529
        %v1895 = vunpack.c.h.b16 %v1529
        %v1896 = vunpack.c.l.b16 %v1530
        %v1897 = vunpack.c.h.b16 %v1530
        %v1898 = vunpack.c.l.b16 %v1531
        %v1899 = vunpack.c.h.b16 %v1531
        %v1900 = vunpack.c.l.b16 %v1532
        %v1901 = vunpack.c.h.b16 %v1532
        %v1902 = vunpack.c.l.b16 %v1533
        %v1903 = vunpack.c.h.b16 %v1533
        %v1904 = vunpack.c.l.b16 %v1534
        %v1905 = vunpack.c.h.b16 %v1534
        %v1906 = vunpack.c.l.b16 %v1535
        %v1907 = vunpack.c.h.b16 %v1535
        %v1908 = vunpack.c.l.b16 %v1536
        %v1909 = vunpack.c.h.b16 %v1536
        %v1910 = vunpack.c.l.b16 %v1537
        %v1911 = vunpack.c.h.b16 %v1537
        %v1912 = vunpack.c.l.b16 %v1538
        %v1913 = vunpack.c.h.b16 %v1538
        %v1914 = vunpack.c.l.b16 %v1539
        %v1915 = vunpack.c.h.b16 %v1539
        %v1916 = vunpack.c.l.b16 %v1540
        %v1917 = vunpack.c.h.b16 %v1540
        %v1918 = vunpack.c.l.b16 %v1541
        %v1919 = vunpack.c.h.b16 %v1541
        %v1920 = vunpack.c.l.b16 %v1542
        %v1921 = vunpack.c.h.b16 %v1542
        %v1922 = vunpack.c.l.b16 %v1543
        %v1923 = vunpack.c.h.b16 %v1543
        %v1924 = vunpack.c.l.b16 %v1544
        %v1925 = vunpack.c.h.b16 %v1544
        %v1926 = vunpack.c.l.b16 %v1545
        %v1927 = vunpack.c.h.b16 %v1545
        %v1928 = vunpack.c.l.b16 %v1546
        %v1929 = vunpack.c.h.b16 %v1546
        %v1930 = vunpack.c.l.b16 %v1547
        %v1931 = vunpack.c.h.b16 %v1547
        %v1932 = vunpack.c.l.b16 %v1548
        %v1933 = vunpack.c.h.b16 %v1548
        %v1934 = vunpack.c.l.b16 %v1549
        %v1935 = vunpack.c.h.b16 %v1549
        %v1936 = vunpack.c.l.b16 %v1550
        %v1937 = vunpack.c.h.b16 %v1550
        %v1938 = vunpack.c.l.b16 %v1551
        %v1939 = vunpack.c.h.b16 %v1551
        %v1940 = vunpack.c.l.b16 %v1552
        %v1941 = vunpack.c.h.b16 %v1552
        %v1942 = vunpack.c.l.b16 %v1553
        %v1943 = vunpack.c.h.b16 %v1553
        %v1944 = vunpack.c.l.b16 %v1554
        %v1945 = vunpack.c.h.b16 %v1554
        %v1946 = vunpack.c.l.b16 %v1555
        %v1947 = vunpack.c.h.b16 %v1555
        %v1948 = vunpack.c.l.b16 %v1556
        %v1949 = vunpack.c.h.b16 %v1556
        %v1950 = vunpack.c.l.b16 %v1557
        %v1951 = vunpack.c.h.b16 %v1557
        %v1952 = vunpack.c.l.b16 %v1558
        %v1953 = vunpack.c.h.b16 %v1558
        %v1954 = vunpack.c.l.b16 %v1559
        %v1955 = vunpack.c.h.b16 %v1559
        %v1956 = vpack.c.b16 %v1702, %v1700
        %v1957 = vpack.c.b16 %v1703, %v1701
        %v1958 = vpack.c.b16 %v1706, %v1704
        %v1959 = vpack.c.b16 %v1707, %v1705
        %v1960 = vpack.c.b16 %v1710, %v1708
        %v1961 = vpack.c.b16 %v1711, %v1709
        %v1962 = vpack.c.b16 %v1714, %v1712
        %v1963 = vpack.c.b16 %v1715, %v1713
        %v1964 = vpack.c.b16 %v1718, %v1716
        %v1965 = vpack.c.b16 %v1719, %v1717
        %v1966 = vpack.c.b16 %v1722, %v1720
        %v1967 = vpack.c.b16 %v1723, %v1721
        %v1968 = vpack.c.b16 %v1726, %v1724
        %v1969 = vpack.c.b16 %v1727, %v1725
        %v1970 = vpack.c.b16 %v1730, %v1728
        %v1971 = vpack.c.b16 %v1731, %v1729
        %v1972 = vpack.c.b16 %v1734, %v1732
        %v1973 = vpack.c.b16 %v1735, %v1733
        %v1974 = vpack.c.b16 %v1738, %v1736
        %v1975 = vpack.c.b16 %v1739, %v1737
        %v1976 = vpack.c.b16 %v1742, %v1740
        %v1977 = vpack.c.b16 %v1743, %v1741
        %v1978 = vpack.c.b16 %v1746, %v1744
        %v1979 = vpack.c.b16 %v1747, %v1745
        %v1980 = vpack.c.b16 %v1750, %v1748
        %v1981 = vpack.c.b16 %v1751, %v1749
        %v1982 = vpack.c.b16 %v1754, %v1752
        %v1983 = vpack.c.b16 %v1755, %v1753
        %v1984 = vpack.c.b16 %v1758, %v1756
        %v1985 = vpack.c.b16 %v1759, %v1757
        %v1986 = vpack.c.b16 %v1762, %v1760
        %v1987 = vpack.c.b16 %v1763, %v1761
        %v1988 = vpack.c.b16 %v1766, %v1764
        %v1989 = vpack.c.b16 %v1767, %v1765
        %v1990 = vpack.c.b16 %v1770, %v1768
        %v1991 = vpack.c.b16 %v1771, %v1769
        %v1992 = vpack.c.b16 %v1774, %v1772
        %v1993 = vpack.c.b16 %v1775, %v1773
        %v1994 = vpack.c.b16 %v1778, %v1776
        %v1995 = vpack.c.b16 %v1779, %v1777
        %v1996 = vpack.c.b16 %v1782, %v1780
        %v1997 = vpack.c.b16 %v1783, %v1781
        %v1998 = vpack.c.b16 %v1786, %v1784
        %v1999 = vpack.c.b16 %v1787, %v1785
        %v2000 = vpack.c.b16 %v1790, %v1788
        %v2001 = vpack.c.b16 %v1791, %v1789
        %v2002 = vpack.c.b16 %v1794, %v1792
        %v2003 = vpack.c.b16 %v1795, %v1793
        %v2004 = vpack.c.b16 %v1798, %v1796
        %v2005 = vpack.c.b16 %v1799, %v1797
        %v2006 = vpack.c.b16 %v1802, %v1800
        %v2007 = vpack.c.b16 %v1803, %v1801
        %v2008 = vpack.c.b16 %v1806, %v1804
        %v2009 = vpack.c.b16 %v1807, %v1805
        %v2010 = vpack.c.b16 %v1810, %v1808
        %v2011 = vpack.c.b16 %v1811, %v1809
        %v2012 = vpack.c.b16 %v1814, %v1812
        %v2013 = vpack.c.b16 %v1815, %v1813
        %v2014 = vpack.c.b16 %v1818, %v1816
        %v2015 = vpack.c.b16 %v1819, %v1817
        %v2016 = vpack.c.b16 %v1822, %v1820
        %v2017 = vpack.c.b16 %v1823, %v1821
        %v2018 = vpack.c.b16 %v1826, %v1824
        %v2019 = vpack.c.b16 %v1827, %v1825
        %v2020 = vpack.c.b16 %v1830, %v1828
        %v2021 = vpack.c.b16 %v1831, %v1829
        %v2022 = vpack.c.b16 %v1834, %v1832
        %v2023 = vpack.c.b16 %v1835, %v1833
        %v2024 = vpack.c.b16 %v1838, %v1836
        %v2025 = vpack.c.b16 %v1839, %v1837
        %v2026 = vpack.c.b16 %v1842, %v1840
        %v2027 = vpack.c.b16 %v1843, %v1841
        %v2028 = vpack.c.b16 %v1846, %v1844
        %v2029 = vpack.c.b16 %v1847, %v1845
        %v2030 = vpack.c.b16 %v1850, %v1848
        %v2031 = vpack.c.b16 %v1851, %v1849
        %v2032 = vpack.c.b16 %v1854, %v1852
        %v2033 = vpack.c.b16 %v1855, %v1853
        %v2034 = vpack.c.b16 %v1858, %v1856
        %v2035 = vpack.c.b16 %v1859, %v1857
        %v2036 = vpack.c.b16 %v1862, %v1860
        %v2037 = vpack.c.b16 %v1863, %v1861
        %v2038 = vpack.c.b16 %v1866, %v1864
        %v2039 = vpack.c.b16 %v1867, %v1865
        %v2040 = vpack.c.b16 %v1870, %v1868
        %v2041 = vpack.c.b16 %v1871, %v1869
        %v2042 = vpack.c.b16 %v1874, %v1872
        %v2043 = vpack.c.b16 %v1875, %v1873
        %v2044 = vpack.c.b16 %v1878, %v1876
        %v2045 = vpack.c.b16 %v1879, %v1877
        %v2046 = vpack.c.b16 %v1882, %v1880
        %v2047 = vpack.c.b16 %v1883, %v1881
        %v2048 = vpack.c.b16 %v1886, %v1884
        %v2049 = vpack.c.b16 %v1887, %v1885
        %v2050 = vpack.c.b16 %v1890, %v1888
        %v2051 = vpack.c.b16 %v1891, %v1889
        %v2052 = vpack.c.b16 %v1894, %v1892
        %v2053 = vpack.c.b16 %v1895, %v1893
        %v2054 = vpack.c.b16 %v1898, %v1896
        %v2055 = vpack.c.b16 %v1899, %v1897
        %v2056 = vpack.c.b16 %v1902, %v1900
        %v2057 = vpack.c.b16 %v1903, %v1901
        %v2058 = vpack.c.b16 %v1906, %v1904
        %v2059 = vpack.c.b16 %v1907, %v1905
        %v2060 = vpack.c.b16 %v1910, %v1908
        %v2061 = vpack.c.b16 %v1911, %v1909
        %v2062 = vpack.c.b16 %v1914, %v1912
        %v2063 = vpack.c.b16 %v1915, %v1913
        %v2064 = vpack.c.b16 %v1918, %v1916
        %v2065 = vpack.c.b16 %v1919, %v1917
        %v2066 = vpack.c.b16 %v1922, %v1920
        %v2067 = vpack.c.b16 %v1923, %v1921
        %v2068 = vpack.c.b16 %v1926, %v1924
        %v2069 = vpack.c.b16 %v1927, %v1925
        %v2070 = vpack.c.b16 %v1930, %v1928
        %v2071 = vpack.c.b16 %v1931, %v1929
        %v2072 = vpack.c.b16 %v1934, %v1932
        %v2073 = vpack.c.b16 %v1935, %v1933
        %v2074 = vpack.c.b16 %v1938, %v1936
        %v2075 = vpack.c.b16 %v1939, %v1937
        %v2076 = vpack.c.b16 %v1942, %v1940
        %v2077 = vpack.c.b16 %v1943, %v1941
        %v2078 = vpack.c.b16 %v1946, %v1944
        %v2079 = vpack.c.b16 %v1947, %v1945
        %v2080 = vpack.c.b16 %v1950, %v1948
        %v2081 = vpack.c.b16 %v1951, %v1949
        %v2082 = vpack.c.b16 %v1954, %v1952
        %v2083 = vpack.c.b16 %v1955, %v1953
        %2212 = vmatprep.subr.bf16.mxu0 %v1971
        %2213 = vmatpush1.bf16.msra.mxu0 %v1970
        %2214 = vmatprep.subr.bf16.mxu0 %v1969
        %2215 = vmatpush1.bf16.msra.mxu0 %v1968
        %2216 = vmatprep.subr.bf16.mxu0 %v1967
        %2217 = vmatpush1.bf16.msra.mxu0 %v1966
        %2218 = vmatprep.subr.bf16.mxu0 %v1965
        %2219 = vmatpush1.bf16.msra.mxu0 %v1964
        %2220 = vmatprep.subr.bf16.mxu0 %v1963
        %2221 = vmatpush1.bf16.msra.mxu0 %v1962
        %2222 = vmatprep.subr.bf16.mxu0 %v1961
        %2223 = vmatpush1.bf16.msra.mxu0 %v1960
        %2224 = vmatprep.subr.bf16.mxu0 %v1959
        %2225 = vmatpush1.bf16.msra.mxu0 %v1958
        %2226 = vmatprep.subr.bf16.mxu0 %v1957
        %2227 = vmatpush1.bf16.msra.mxu0 %v1956
        %2228 = vmatprep.subr.bf16.mxu0 %v1987
        %2229 = vmatpush2.bf16.msra.mxu0 %v1986
        %2230 = vmatprep.subr.bf16.mxu0 %v1985
        %2231 = vmatpush2.bf16.msra.mxu0 %v1984
        %2232 = vmatprep.subr.bf16.mxu0 %v1983
        %2233 = vmatpush2.bf16.msra.mxu0 %v1982
        %2234 = vmatprep.subr.bf16.mxu0 %v1981
        %2235 = vmatpush2.bf16.msra.mxu0 %v1980
        %2236 = vmatprep.subr.bf16.mxu0 %v1979
        %2237 = vmatpush2.bf16.msra.mxu0 %v1978
        %2238 = vmatprep.subr.bf16.mxu0 %v1977
        %2239 = vmatpush2.bf16.msra.mxu0 %v1976
        %2240 = vmatprep.subr.bf16.mxu0 %v1975
        %2241 = vmatpush2.bf16.msra.mxu0 %v1974
        %2242 = vmatprep.subr.bf16.mxu0 %v1973
        %2243 = vmatpush2.bf16.msra.mxu0 %v1972
        %2244 = vmatprep.mubr.bf16.mxu0 %v1377
        %2245 = vmatmul.mubr.bf16.gmra.mxu0 %v1376
        %v2246 = vpop.f32.mrf.mxu0
        %v2247 = vadd.f32 %v1565, %v2246
        %v2248 = vpop.f32.mrf.mxu0
        %v2249 = vadd.f32 %v1569, %v2248
        %v2250 = vpop.f32.mrf.mxu0
        %v2251 = vadd.f32 %v1565, %v2250
        %v2252 = vpop.f32.mrf.mxu0
        %v2253 = vadd.f32 %v1569, %v2252
        %2254 = vmatprep.mubr.bf16.mxu0 %v1385
        %2255 = vmatmul.mubr.bf16.gmra.mxu0 %v1384
        %v2256 = vpop.f32.mrf.mxu0
        %v2257 = vadd.f32 %v1565, %v2256
        %v2258 = vpop.f32.mrf.mxu0
        %v2259 = vadd.f32 %v1569, %v2258
        %v2260 = vpop.f32.mrf.mxu0
        %v2261 = vadd.f32 %v1565, %v2260
        %v2262 = vpop.f32.mrf.mxu0
        %v2263 = vadd.f32 %v1569, %v2262
        %2264 = vmatprep.mubr.bf16.mxu0 %v1393
        %2265 = vmatmul.mubr.bf16.gmra.mxu0 %v1392
        %v2266 = vpop.f32.mrf.mxu0
        %v2267 = vadd.f32 %v1565, %v2266
        %v2268 = vpop.f32.mrf.mxu0
        %v2269 = vadd.f32 %v1569, %v2268
        %v2270 = vpop.f32.mrf.mxu0
        %v2271 = vadd.f32 %v1565, %v2270
        %v2272 = vpop.f32.mrf.mxu0
        %v2273 = vadd.f32 %v1569, %v2272
        %2274 = vmatprep.mubr.bf16.mxu0 %v1401
        %2275 = vmatmul.mubr.bf16.gmra.mxu0 %v1400
        %v2276 = vpop.f32.mrf.mxu0
        %v2277 = vadd.f32 %v1565, %v2276
        %v2278 = vpop.f32.mrf.mxu0
        %v2279 = vadd.f32 %v1569, %v2278
        %v2280 = vpop.f32.mrf.mxu0
        %v2281 = vadd.f32 %v1565, %v2280
        %v2282 = vpop.f32.mrf.mxu0
        %v2283 = vadd.f32 %v1569, %v2282
        %2284 = vmatprep.mubr.bf16.mxu0 %v1409
        %2285 = vmatmul.mubr.bf16.gmra.mxu0 %v1408
        %v2286 = vpop.f32.mrf.mxu0
        %v2287 = vadd.f32 %v1565, %v2286
        %v2288 = vpop.f32.mrf.mxu0
        %v2289 = vadd.f32 %v1569, %v2288
        %v2290 = vpop.f32.mrf.mxu0
        %v2291 = vadd.f32 %v1565, %v2290
        %v2292 = vpop.f32.mrf.mxu0
        %v2293 = vadd.f32 %v1569, %v2292
        %2294 = vmatprep.mubr.bf16.mxu0 %v1417
        %2295 = vmatmul.mubr.bf16.gmra.mxu0 %v1416
        %v2296 = vpop.f32.mrf.mxu0
        %v2297 = vadd.f32 %v1565, %v2296
        %v2298 = vpop.f32.mrf.mxu0
        %v2299 = vadd.f32 %v1569, %v2298
        %v2300 = vpop.f32.mrf.mxu0
        %v2301 = vadd.f32 %v1565, %v2300
        %v2302 = vpop.f32.mrf.mxu0
        %v2303 = vadd.f32 %v1569, %v2302
        %2304 = vmatprep.mubr.bf16.mxu0 %v1425
        %2305 = vmatmul.mubr.bf16.gmra.mxu0 %v1424
        %v2306 = vpop.f32.mrf.mxu0
        %v2307 = vadd.f32 %v1565, %v2306
        %v2308 = vpop.f32.mrf.mxu0
        %v2309 = vadd.f32 %v1569, %v2308
        %v2310 = vpop.f32.mrf.mxu0
        %v2311 = vadd.f32 %v1565, %v2310
        %v2312 = vpop.f32.mrf.mxu0
        %v2313 = vadd.f32 %v1569, %v2312
        %2314 = vdwg.mxu0
        %2315 = vmatprep.subr.bf16.mxu0 %v2003
        %2316 = vmatpush1.bf16.msra.mxu0 %v2002
        %2317 = vmatprep.subr.bf16.mxu0 %v2001
        %2318 = vmatpush1.bf16.msra.mxu0 %v2000
        %2319 = vmatprep.subr.bf16.mxu0 %v1999
        %2320 = vmatpush1.bf16.msra.mxu0 %v1998
        %2321 = vmatprep.subr.bf16.mxu0 %v1997
        %2322 = vmatpush1.bf16.msra.mxu0 %v1996
        %2323 = vmatprep.subr.bf16.mxu0 %v1995
        %2324 = vmatpush1.bf16.msra.mxu0 %v1994
        %2325 = vmatprep.subr.bf16.mxu0 %v1993
        %2326 = vmatpush1.bf16.msra.mxu0 %v1992
        %2327 = vmatprep.subr.bf16.mxu0 %v1991
        %2328 = vmatpush1.bf16.msra.mxu0 %v1990
        %2329 = vmatprep.subr.bf16.mxu0 %v1989
        %2330 = vmatpush1.bf16.msra.mxu0 %v1988
        %2331 = vmatprep.subr.bf16.mxu0 %v2019
        %2332 = vmatpush2.bf16.msra.mxu0 %v2018
        %2333 = vmatprep.subr.bf16.mxu0 %v2017
        %2334 = vmatpush2.bf16.msra.mxu0 %v2016
        %2335 = vmatprep.subr.bf16.mxu0 %v2015
        %2336 = vmatpush2.bf16.msra.mxu0 %v2014
        %2337 = vmatprep.subr.bf16.mxu0 %v2013
        %2338 = vmatpush2.bf16.msra.mxu0 %v2012
        %2339 = vmatprep.subr.bf16.mxu0 %v2011
        %2340 = vmatpush2.bf16.msra.mxu0 %v2010
        %2341 = vmatprep.subr.bf16.mxu0 %v2009
        %2342 = vmatpush2.bf16.msra.mxu0 %v2008
        %2343 = vmatprep.subr.bf16.mxu0 %v2007
        %2344 = vmatpush2.bf16.msra.mxu0 %v2006
        %2345 = vmatprep.subr.bf16.mxu0 %v2005
        %2346 = vmatpush2.bf16.msra.mxu0 %v2004
        %2347 = vmatprep.mubr.bf16.mxu0 %v1379
        %2348 = vmatmul.mubr.bf16.gmra.mxu0 %v1378
        %v2349 = vpop.f32.mrf.mxu0
        %v2350 = vadd.f32 %v2247, %v2349
        %v2351 = vpop.f32.mrf.mxu0
        %v2352 = vadd.f32 %v2249, %v2351
        %v2353 = vpop.f32.mrf.mxu0
        %v2354 = vadd.f32 %v2251, %v2353
        %v2355 = vpop.f32.mrf.mxu0
        %v2356 = vadd.f32 %v2253, %v2355
        %2357 = vmatprep.mubr.bf16.mxu0 %v1387
        %2358 = vmatmul.mubr.bf16.gmra.mxu0 %v1386
        %v2359 = vpop.f32.mrf.mxu0
        %v2360 = vadd.f32 %v2257, %v2359
        %v2361 = vpop.f32.mrf.mxu0
        %v2362 = vadd.f32 %v2259, %v2361
        %v2363 = vpop.f32.mrf.mxu0
        %v2364 = vadd.f32 %v2261, %v2363
        %v2365 = vpop.f32.mrf.mxu0
        %v2366 = vadd.f32 %v2263, %v2365
        %2367 = vmatprep.mubr.bf16.mxu0 %v1395
        %2368 = vmatmul.mubr.bf16.gmra.mxu0 %v1394
        %v2369 = vpop.f32.mrf.mxu0
        %v2370 = vadd.f32 %v2267, %v2369
        %v2371 = vpop.f32.mrf.mxu0
        %v2372 = vadd.f32 %v2269, %v2371
        %v2373 = vpop.f32.mrf.mxu0
        %v2374 = vadd.f32 %v2271, %v2373
        %v2375 = vpop.f32.mrf.mxu0
        %v2376 = vadd.f32 %v2273, %v2375
        %2377 = vmatprep.mubr.bf16.mxu0 %v1403
        %2378 = vmatmul.mubr.bf16.gmra.mxu0 %v1402
        %v2379 = vpop.f32.mrf.mxu0
        %v2380 = vadd.f32 %v2277, %v2379
        %v2381 = vpop.f32.mrf.mxu0
        %v2382 = vadd.f32 %v2279, %v2381
        %v2383 = vpop.f32.mrf.mxu0
        %v2384 = vadd.f32 %v2281, %v2383
        %v2385 = vpop.f32.mrf.mxu0
        %v2386 = vadd.f32 %v2283, %v2385
        %2387 = vmatprep.mubr.bf16.mxu0 %v1411
        %2388 = vmatmul.mubr.bf16.gmra.mxu0 %v1410
        %v2389 = vpop.f32.mrf.mxu0
        %v2390 = vadd.f32 %v2287, %v2389
        %v2391 = vpop.f32.mrf.mxu0
        %v2392 = vadd.f32 %v2289, %v2391
        %v2393 = vpop.f32.mrf.mxu0
        %v2394 = vadd.f32 %v2291, %v2393
        %v2395 = vpop.f32.mrf.mxu0
        %v2396 = vadd.f32 %v2293, %v2395
        %2397 = vmatprep.mubr.bf16.mxu0 %v1419
        %2398 = vmatmul.mubr.bf16.gmra.mxu0 %v1418
        %v2399 = vpop.f32.mrf.mxu0
        %v2400 = vadd.f32 %v2297, %v2399
        %v2401 = vpop.f32.mrf.mxu0
        %v2402 = vadd.f32 %v2299, %v2401
        %v2403 = vpop.f32.mrf.mxu0
        %v2404 = vadd.f32 %v2301, %v2403
        %v2405 = vpop.f32.mrf.mxu0
        %v2406 = vadd.f32 %v2303, %v2405
        %2407 = vmatprep.mubr.bf16.mxu0 %v1427
        %2408 = vmatmul.mubr.bf16.gmra.mxu0 %v1426
        %v2409 = vpop.f32.mrf.mxu0
        %v2410 = vadd.f32 %v2307, %v2409
        %v2411 = vpop.f32.mrf.mxu0
        %v2412 = vadd.f32 %v2309, %v2411
        %v2413 = vpop.f32.mrf.mxu0
        %v2414 = vadd.f32 %v2311, %v2413
        %v2415 = vpop.f32.mrf.mxu0
        %v2416 = vadd.f32 %v2313, %v2415
        %2417 = vdwg.mxu0
        %2418 = vmatprep.subr.bf16.mxu0 %v2035
        %2419 = vmatpush1.bf16.msra.mxu0 %v2034
        %2420 = vmatprep.subr.bf16.mxu0 %v2033
        %2421 = vmatpush1.bf16.msra.mxu0 %v2032
        %2422 = vmatprep.subr.bf16.mxu0 %v2031
        %2423 = vmatpush1.bf16.msra.mxu0 %v2030
        %2424 = vmatprep.subr.bf16.mxu0 %v2029
        %2425 = vmatpush1.bf16.msra.mxu0 %v2028
        %2426 = vmatprep.subr.bf16.mxu0 %v2027
        %2427 = vmatpush1.bf16.msra.mxu0 %v2026
        %2428 = vmatprep.subr.bf16.mxu0 %v2025
        %2429 = vmatpush1.bf16.msra.mxu0 %v2024
        %2430 = vmatprep.subr.bf16.mxu0 %v2023
        %2431 = vmatpush1.bf16.msra.mxu0 %v2022
        %2432 = vmatprep.subr.bf16.mxu0 %v2021
        %2433 = vmatpush1.bf16.msra.mxu0 %v2020
        %2434 = vmatprep.subr.bf16.mxu0 %v2051
        %2435 = vmatpush2.bf16.msra.mxu0 %v2050
        %2436 = vmatprep.subr.bf16.mxu0 %v2049
        %2437 = vmatpush2.bf16.msra.mxu0 %v2048
        %2438 = vmatprep.subr.bf16.mxu0 %v2047
        %2439 = vmatpush2.bf16.msra.mxu0 %v2046
        %2440 = vmatprep.subr.bf16.mxu0 %v2045
        %2441 = vmatpush2.bf16.msra.mxu0 %v2044
        %2442 = vmatprep.subr.bf16.mxu0 %v2043
        %2443 = vmatpush2.bf16.msra.mxu0 %v2042
        %2444 = vmatprep.subr.bf16.mxu0 %v2041
        %2445 = vmatpush2.bf16.msra.mxu0 %v2040
        %2446 = vmatprep.subr.bf16.mxu0 %v2039
        %2447 = vmatpush2.bf16.msra.mxu0 %v2038
        %2448 = vmatprep.subr.bf16.mxu0 %v2037
        %2449 = vmatpush2.bf16.msra.mxu0 %v2036
        %2450 = vmatprep.mubr.bf16.mxu0 %v1381
        %2451 = vmatmul.mubr.bf16.gmra.mxu0 %v1380
        %v2452 = vpop.f32.mrf.mxu0
        %v2453 = vadd.f32 %v2350, %v2452
        %v2454 = vpop.f32.mrf.mxu0
        %v2455 = vadd.f32 %v2352, %v2454
        %v2456 = vpop.f32.mrf.mxu0
        %v2457 = vadd.f32 %v2354, %v2456
        %v2458 = vpop.f32.mrf.mxu0
        %v2459 = vadd.f32 %v2356, %v2458
        %2460 = vmatprep.mubr.bf16.mxu0 %v1389
        %2461 = vmatmul.mubr.bf16.gmra.mxu0 %v1388
        %v2462 = vpop.f32.mrf.mxu0
        %v2463 = vadd.f32 %v2360, %v2462
        %v2464 = vpop.f32.mrf.mxu0
        %v2465 = vadd.f32 %v2362, %v2464
        %v2466 = vpop.f32.mrf.mxu0
        %v2467 = vadd.f32 %v2364, %v2466
        %v2468 = vpop.f32.mrf.mxu0
        %v2469 = vadd.f32 %v2366, %v2468
        %2470 = vmatprep.mubr.bf16.mxu0 %v1397
        %2471 = vmatmul.mubr.bf16.gmra.mxu0 %v1396
        %v2472 = vpop.f32.mrf.mxu0
        %v2473 = vadd.f32 %v2370, %v2472
        %v2474 = vpop.f32.mrf.mxu0
        %v2475 = vadd.f32 %v2372, %v2474
        %v2476 = vpop.f32.mrf.mxu0
        %v2477 = vadd.f32 %v2374, %v2476
        %v2478 = vpop.f32.mrf.mxu0
        %v2479 = vadd.f32 %v2376, %v2478
        %2480 = vmatprep.mubr.bf16.mxu0 %v1405
        %2481 = vmatmul.mubr.bf16.gmra.mxu0 %v1404
        %v2482 = vpop.f32.mrf.mxu0
        %v2483 = vadd.f32 %v2380, %v2482
        %v2484 = vpop.f32.mrf.mxu0
        %v2485 = vadd.f32 %v2382, %v2484
        %v2486 = vpop.f32.mrf.mxu0
        %v2487 = vadd.f32 %v2384, %v2486
        %v2488 = vpop.f32.mrf.mxu0
        %v2489 = vadd.f32 %v2386, %v2488
        %2490 = vmatprep.mubr.bf16.mxu0 %v1413
        %2491 = vmatmul.mubr.bf16.gmra.mxu0 %v1412
        %v2492 = vpop.f32.mrf.mxu0
        %v2493 = vadd.f32 %v2390, %v2492
        %v2494 = vpop.f32.mrf.mxu0
        %v2495 = vadd.f32 %v2392, %v2494
        %v2496 = vpop.f32.mrf.mxu0
        %v2497 = vadd.f32 %v2394, %v2496
        %v2498 = vpop.f32.mrf.mxu0
        %v2499 = vadd.f32 %v2396, %v2498
        %2500 = vmatprep.mubr.bf16.mxu0 %v1421
        %2501 = vmatmul.mubr.bf16.gmra.mxu0 %v1420
        %v2502 = vpop.f32.mrf.mxu0
        %v2503 = vadd.f32 %v2400, %v2502
        %v2504 = vpop.f32.mrf.mxu0
        %v2505 = vadd.f32 %v2402, %v2504
        %v2506 = vpop.f32.mrf.mxu0
        %v2507 = vadd.f32 %v2404, %v2506
        %v2508 = vpop.f32.mrf.mxu0
        %v2509 = vadd.f32 %v2406, %v2508
        %2510 = vmatprep.mubr.bf16.mxu0 %v1429
        %2511 = vmatmul.mubr.bf16.gmra.mxu0 %v1428
        %v2512 = vpop.f32.mrf.mxu0
        %v2513 = vadd.f32 %v2410, %v2512
        %v2514 = vpop.f32.mrf.mxu0
        %v2515 = vadd.f32 %v2412, %v2514
        %v2516 = vpop.f32.mrf.mxu0
        %v2517 = vadd.f32 %v2414, %v2516
        %v2518 = vpop.f32.mrf.mxu0
        %v2519 = vadd.f32 %v2416, %v2518
        %2520 = vdwg.mxu0
        %2521 = vmatprep.subr.bf16.mxu0 %v2067
        %2522 = vmatpush1.bf16.msra.mxu0 %v2066
        %2523 = vmatprep.subr.bf16.mxu0 %v2065
        %2524 = vmatpush1.bf16.msra.mxu0 %v2064
        %2525 = vmatprep.subr.bf16.mxu0 %v2063
        %2526 = vmatpush1.bf16.msra.mxu0 %v2062
        %2527 = vmatprep.subr.bf16.mxu0 %v2061
        %2528 = vmatpush1.bf16.msra.mxu0 %v2060
        %2529 = vmatprep.subr.bf16.mxu0 %v2059
        %2530 = vmatpush1.bf16.msra.mxu0 %v2058
        %2531 = vmatprep.subr.bf16.mxu0 %v2057
        %2532 = vmatpush1.bf16.msra.mxu0 %v2056
        %2533 = vmatprep.subr.bf16.mxu0 %v2055
        %2534 = vmatpush1.bf16.msra.mxu0 %v2054
        %2535 = vmatprep.subr.bf16.mxu0 %v2053
        %2536 = vmatpush1.bf16.msra.mxu0 %v2052
        %2537 = vmatprep.subr.bf16.mxu0 %v2083
        %2538 = vmatpush2.bf16.msra.mxu0 %v2082
        %2539 = vmatprep.subr.bf16.mxu0 %v2081
        %2540 = vmatpush2.bf16.msra.mxu0 %v2080
        %2541 = vmatprep.subr.bf16.mxu0 %v2079
        %2542 = vmatpush2.bf16.msra.mxu0 %v2078
        %2543 = vmatprep.subr.bf16.mxu0 %v2077
        %2544 = vmatpush2.bf16.msra.mxu0 %v2076
        %2545 = vmatprep.subr.bf16.mxu0 %v2075
        %2546 = vmatpush2.bf16.msra.mxu0 %v2074
        %2547 = vmatprep.subr.bf16.mxu0 %v2073
        %2548 = vmatpush2.bf16.msra.mxu0 %v2072
        %2549 = vmatprep.subr.bf16.mxu0 %v2071
        %2550 = vmatpush2.bf16.msra.mxu0 %v2070
        %2551 = vmatprep.subr.bf16.mxu0 %v2069
        %2552 = vmatpush2.bf16.msra.mxu0 %v2068
        %2553 = vmatprep.mubr.bf16.mxu0 %v1383
        %2554 = vmatmul.mubr.bf16.gmra.mxu0 %v1382
        %v2555 = vpop.f32.mrf.mxu0
        %v2556 = vadd.f32 %v2453, %v2555
        %v2557 = vpop.f32.mrf.mxu0
        %v2558 = vadd.f32 %v2455, %v2557
        %v2559 = vpop.f32.mrf.mxu0
        %v2560 = vadd.f32 %v2457, %v2559
        %v2561 = vpop.f32.mrf.mxu0
        %v2562 = vadd.f32 %v2459, %v2561
        %2563 = vmatprep.mubr.bf16.mxu0 %v1391
        %2564 = vmatmul.mubr.bf16.gmra.mxu0 %v1390
        %v2565 = vpop.f32.mrf.mxu0
        %v2566 = vadd.f32 %v2463, %v2565
        %v2567 = vpop.f32.mrf.mxu0
        %v2568 = vadd.f32 %v2465, %v2567
        %v2569 = vpop.f32.mrf.mxu0
        %v2570 = vadd.f32 %v2467, %v2569
        %v2571 = vpop.f32.mrf.mxu0
        %v2572 = vadd.f32 %v2469, %v2571
        %2573 = vmatprep.mubr.bf16.mxu0 %v1399
        %2574 = vmatmul.mubr.bf16.gmra.mxu0 %v1398
        %v2575 = vpop.f32.mrf.mxu0
        %v2576 = vadd.f32 %v2473, %v2575
        %v2577 = vpop.f32.mrf.mxu0
        %v2578 = vadd.f32 %v2475, %v2577
        %v2579 = vpop.f32.mrf.mxu0
        %v2580 = vadd.f32 %v2477, %v2579
        %v2581 = vpop.f32.mrf.mxu0
        %v2582 = vadd.f32 %v2479, %v2581
        %2583 = vmatprep.mubr.bf16.mxu0 %v1407
        %2584 = vmatmul.mubr.bf16.gmra.mxu0 %v1406
        %v2585 = vpop.f32.mrf.mxu0
        %v2586 = vadd.f32 %v2483, %v2585
        %v2587 = vpop.f32.mrf.mxu0
        %v2588 = vadd.f32 %v2485, %v2587
        %v2589 = vpop.f32.mrf.mxu0
        %v2590 = vadd.f32 %v2487, %v2589
        %v2591 = vpop.f32.mrf.mxu0
        %v2592 = vadd.f32 %v2489, %v2591
        %2593 = vmatprep.mubr.bf16.mxu0 %v1415
        %2594 = vmatmul.mubr.bf16.gmra.mxu0 %v1414
        %v2595 = vpop.f32.mrf.mxu0
        %v2596 = vadd.f32 %v2493, %v2595
        %v2597 = vpop.f32.mrf.mxu0
        %v2598 = vadd.f32 %v2495, %v2597
        %v2599 = vpop.f32.mrf.mxu0
        %v2600 = vadd.f32 %v2497, %v2599
        %v2601 = vpop.f32.mrf.mxu0
        %v2602 = vadd.f32 %v2499, %v2601
        %2603 = vmatprep.mubr.bf16.mxu0 %v1423
        %2604 = vmatmul.mubr.bf16.gmra.mxu0 %v1422
        %v2605 = vpop.f32.mrf.mxu0
        %v2606 = vadd.f32 %v2503, %v2605
        %v2607 = vpop.f32.mrf.mxu0
        %v2608 = vadd.f32 %v2505, %v2607
        %v2609 = vpop.f32.mrf.mxu0
        %v2610 = vadd.f32 %v2507, %v2609
        %v2611 = vpop.f32.mrf.mxu0
        %v2612 = vadd.f32 %v2509, %v2611
        %2613 = vmatprep.mubr.bf16.mxu0 %v1431
        %2614 = vmatmul.mubr.bf16.gmra.mxu0 %v1430
        %v2615 = vpop.f32.mrf.mxu0
        %v2616 = vadd.f32 %v2513, %v2615
        %v2617 = vpop.f32.mrf.mxu0
        %v2618 = vadd.f32 %v2515, %v2617
        %v2619 = vpop.f32.mrf.mxu0
        %v2620 = vadd.f32 %v2517, %v2619
        %v2621 = vpop.f32.mrf.mxu0
        %v2622 = vadd.f32 %v2519, %v2621
        %2623 = vdwg.mxu0
        %v2624 = vmax.f32 %v2556, 0.0
        %v2625 = vmax.f32 %v2558, 0.0
        %v2626 = vmax.f32 %v2560, 0.0
        %v2627 = vmax.f32 %v2562, 0.0
        %v2628 = vmax.f32 %v2566, 0.0
        %v2629 = vmax.f32 %v2568, 0.0
        %v2630 = vmax.f32 %v2570, 0.0
        %v2631 = vmax.f32 %v2572, 0.0
        %v2632 = vmax.f32 %v2576, 0.0
        %v2633 = vmax.f32 %v2578, 0.0
        %v2634 = vmax.f32 %v2580, 0.0
        %v2635 = vmax.f32 %v2582, 0.0
        %v2636 = vmax.f32 %v2586, 0.0
        %v2637 = vmax.f32 %v2588, 0.0
        %v2638 = vmax.f32 %v2590, 0.0
        %v2639 = vmax.f32 %v2592, 0.0
        %v2640 = vmax.f32 %v2596, 0.0
        %v2641 = vmax.f32 %v2598, 0.0
        %v2642 = vmax.f32 %v2600, 0.0
        %v2643 = vmax.f32 %v2602, 0.0
        %v2644 = vmax.f32 %v2606, 0.0
        %v2645 = vmax.f32 %v2608, 0.0
        %v2646 = vmax.f32 %v2610, 0.0
        %v2647 = vmax.f32 %v2612, 0.0
        %v2648 = vmax.f32 %v2616, 0.0
        %v2649 = vmax.f32 %v2618, 0.0
        %v2650 = vmax.f32 %v2620, 0.0
        %v2651 = vmax.f32 %v2622, 0.0
        %v2652 = vpack.c.bf16 %v2626, %v2624
        %v2653 = vpack.c.bf16 %v2627, %v2625
        %v2654 = vpack.c.bf16 %v2630, %v2628
        %v2655 = vpack.c.bf16 %v2631, %v2629
        %v2656 = vpack.c.bf16 %v2634, %v2632
        %v2657 = vpack.c.bf16 %v2635, %v2633
        %v2658 = vpack.c.bf16 %v2638, %v2636
        %v2659 = vpack.c.bf16 %v2639, %v2637
        %v2660 = vpack.c.bf16 %v2642, %v2640
        %v2661 = vpack.c.bf16 %v2643, %v2641
        %v2662 = vpack.c.bf16 %v2646, %v2644
        %v2663 = vpack.c.bf16 %v2647, %v2645
        %v2664 = vpack.c.bf16 %v2650, %v2648
        %v2665 = vpack.c.bf16 %v2651, %v2649
        %v2666 = vld [vmem:[#allocation10] sm:$0xf]
        %v2667 = vld [vmem:[#allocation10 + $0x4] sm:$0xf]
        %v2668 = vld [vmem:[#allocation10 + $0x8] sm:$0xf]
        %v2669 = vld [vmem:[#allocation10 + $0xc] sm:$0xf]
        %v2670 = vld [vmem:[#allocation10 + $0x10] sm:$0xf]
        %v2671 = vld [vmem:[#allocation10 + $0x14] sm:$0xf]
        %v2672 = vld [vmem:[#allocation10 + $0x18] sm:$0xf]
        %v2673 = vld [vmem:[#allocation10 + $0x1c] sm:$0xf]
        %v2674 = vld [vmem:[#allocation10 + $0x20] sm:$0xf]
        %v2675 = vld [vmem:[#allocation10 + $0x24] sm:$0xf]
        %v2676 = vld [vmem:[#allocation10 + $0x28] sm:$0xf]
        %v2677 = vld [vmem:[#allocation10 + $0x2c] sm:$0xf]
        %v2678 = vld [vmem:[#allocation10 + $0x30] sm:$0xf]
        %v2679 = vld [vmem:[#allocation10 + $0x34] sm:$0xf]
        %v2680 = vld [vmem:[#allocation10 + $0x38] sm:$0xf]
        %v2681 = vld [vmem:[#allocation10 + $0x3c] sm:$0xf]
        %v2682 = vld [vmem:[#allocation10 + $0x40] sm:$0xf]
        %v2683 = vld [vmem:[#allocation10 + $0x44] sm:$0xf]
        %v2684 = vld [vmem:[#allocation10 + $0x48] sm:$0xf]
        %v2685 = vld [vmem:[#allocation10 + $0x4c] sm:$0xf]
        %v2686 = vld [vmem:[#allocation10 + $0x50] sm:$0xf]
        %v2687 = vld [vmem:[#allocation10 + $0x54] sm:$0xf]
        %v2688 = vld [vmem:[#allocation10 + $0x58] sm:$0xf]
        %v2689 = vld [vmem:[#allocation10 + $0x5c] sm:$0xf]
        %v2690 = vld [vmem:[#allocation10 + $0x60] sm:$0xf]
        %v2691 = vld [vmem:[#allocation10 + $0x64] sm:$0xf]
        %v2692 = vld [vmem:[#allocation10 + $0x68] sm:$0xf]
        %v2693 = vld [vmem:[#allocation10 + $0x6c] sm:$0xf]
        %v2694 = vld [vmem:[#allocation10 + $0x70] sm:$0xf]
        %v2695 = vld [vmem:[#allocation10 + $0x74] sm:$0xf]
        %v2696 = vld [vmem:[#allocation10 + $0x78] sm:$0xf]
        %v2697 = vld [vmem:[#allocation10 + $0x7c] sm:$0xf]
        %v2698 = vld [vmem:[%s6] sm:$0x1]
        %v2700 = vlaneseq
        %v2701 = vshrl.u32 %v2700, 7
        %v2702 = vsub.s32 0, %v2701
        %v2703 = vrot.slane %v2698, %v2702
        %v2737 = vunpack.c.l.b16 %v2666
        %v2738 = vunpack.c.l.b16 %v2667
        %v2739 = vunpack.c.l.b16 %v2668
        %v2740 = vunpack.c.l.b16 %v2669
        %v2741 = vunpack.c.l.b16 %v2670
        %v2742 = vunpack.c.l.b16 %v2671
        %v2743 = vunpack.c.l.b16 %v2672
        %v2744 = vunpack.c.l.b16 %v2673
        %v2745 = vunpack.c.l.b16 %v2674
        %v2746 = vunpack.c.l.b16 %v2675
        %v2747 = vunpack.c.l.b16 %v2676
        %v2748 = vunpack.c.l.b16 %v2677
        %v2749 = vunpack.c.l.b16 %v2678
        %v2750 = vunpack.c.l.b16 %v2679
        %v2751 = vunpack.c.l.b16 %v2680
        %v2752 = vunpack.c.l.b16 %v2681
        %v2753 = vunpack.c.l.b16 %v2682
        %v2754 = vunpack.c.l.b16 %v2683
        %v2755 = vunpack.c.l.b16 %v2684
        %v2756 = vunpack.c.l.b16 %v2685
        %v2757 = vunpack.c.l.b16 %v2686
        %v2758 = vunpack.c.l.b16 %v2687
        %v2759 = vunpack.c.l.b16 %v2688
        %v2760 = vunpack.c.l.b16 %v2689
        %v2761 = vunpack.c.l.b16 %v2690
        %v2762 = vunpack.c.l.b16 %v2691
        %v2763 = vunpack.c.l.b16 %v2692
        %v2764 = vunpack.c.l.b16 %v2693
        %v2765 = vunpack.c.l.b16 %v2694
        %v2766 = vunpack.c.l.b16 %v2695
        %v2767 = vunpack.c.l.b16 %v2696
        %v2768 = vunpack.c.l.b16 %v2697
        %v2769 = vpack.c.b16 %v2738, %v2737
        %v2770 = vpack.c.b16 %v2740, %v2739
        %v2771 = vpack.c.b16 %v2742, %v2741
        %v2772 = vpack.c.b16 %v2744, %v2743
        %v2773 = vpack.c.b16 %v2746, %v2745
        %v2774 = vpack.c.b16 %v2748, %v2747
        %v2775 = vpack.c.b16 %v2750, %v2749
        %v2776 = vpack.c.b16 %v2752, %v2751
        %v2777 = vpack.c.b16 %v2754, %v2753
        %v2778 = vpack.c.b16 %v2756, %v2755
        %v2779 = vpack.c.b16 %v2758, %v2757
        %v2780 = vpack.c.b16 %v2760, %v2759
        %v2781 = vpack.c.b16 %v2762, %v2761
        %v2782 = vpack.c.b16 %v2764, %v2763
        %v2783 = vpack.c.b16 %v2766, %v2765
        %v2784 = vpack.c.b16 %v2768, %v2767
        %2801 = vmatprep.subr.bf16.mxu0 0
        %2802 = vmatpush1.bf16.msra.mxu0 %v2776
        %2803 = vmatprep.subr.bf16.mxu0 0
        %2804 = vmatpush1.bf16.msra.mxu0 %v2775
        %2805 = vmatprep.subr.bf16.mxu0 0
        %2806 = vmatpush1.bf16.msra.mxu0 %v2774
        %2807 = vmatprep.subr.bf16.mxu0 0
        %2808 = vmatpush1.bf16.msra.mxu0 %v2773
        %2809 = vmatprep.subr.bf16.mxu0 0
        %2810 = vmatpush1.bf16.msra.mxu0 %v2772
        %2811 = vmatprep.subr.bf16.mxu0 0
        %2812 = vmatpush1.bf16.msra.mxu0 %v2771
        %2813 = vmatprep.subr.bf16.mxu0 0
        %2814 = vmatpush1.bf16.msra.mxu0 %v2770
        %2815 = vmatprep.subr.bf16.mxu0 0
        %2816 = vmatpush1.bf16.msra.mxu0 %v2769
        %2817 = vmatprep.subr.bf16.mxu0 0
        %2818 = vmatpush2.bf16.msra.mxu0 %v2784
        %2819 = vmatprep.subr.bf16.mxu0 0
        %2820 = vmatpush2.bf16.msra.mxu0 %v2783
        %2821 = vmatprep.subr.bf16.mxu0 0
        %2822 = vmatpush2.bf16.msra.mxu0 %v2782
        %2823 = vmatprep.subr.bf16.mxu0 0
        %2824 = vmatpush2.bf16.msra.mxu0 %v2781
        %2825 = vmatprep.subr.bf16.mxu0 0
        %2826 = vmatpush2.bf16.msra.mxu0 %v2780
        %2827 = vmatprep.subr.bf16.mxu0 0
        %2828 = vmatpush2.bf16.msra.mxu0 %v2779
        %2829 = vmatprep.subr.bf16.mxu0 0
        %2830 = vmatpush2.bf16.msra.mxu0 %v2778
        %2831 = vmatprep.subr.bf16.mxu0 0
        %2832 = vmatpush2.bf16.msra.mxu0 %v2777
        %2833 = vmatprep.mubr.bf16.mxu0 %v2653
        %2834 = vmatmul.mubr.bf16.gmra.mxu0 %v2652
        %v2835 = vpop.f32.mrf.mxu0
        %v2836 = vadd.f32 %v2703, %v2835
        %v2837 = vpop.f32.mrf.mxu0
        %v2838 = vpop.f32.mrf.mxu0
        %v2839 = vadd.f32 %v2703, %v2838
        %v2840 = vpop.f32.mrf.mxu0
        %2841 = vmatprep.mubr.bf16.mxu0 %v2655
        %2842 = vmatmul.mubr.bf16.gmra.mxu0 %v2654
        %v2843 = vpop.f32.mrf.mxu0
        %v2844 = vadd.f32 %v2703, %v2843
        %v2845 = vpop.f32.mrf.mxu0
        %v2846 = vpop.f32.mrf.mxu0
        %v2847 = vadd.f32 %v2703, %v2846
        %v2848 = vpop.f32.mrf.mxu0
        %2849 = vmatprep.mubr.bf16.mxu0 %v2657
        %2850 = vmatmul.mubr.bf16.gmra.mxu0 %v2656
        %v2851 = vpop.f32.mrf.mxu0
        %v2852 = vadd.f32 %v2703, %v2851
        %v2853 = vpop.f32.mrf.mxu0
        %v2854 = vpop.f32.mrf.mxu0
        %v2855 = vadd.f32 %v2703, %v2854
        %v2856 = vpop.f32.mrf.mxu0
        %2857 = vmatprep.mubr.bf16.mxu0 %v2659
        %2858 = vmatmul.mubr.bf16.gmra.mxu0 %v2658
        %v2859 = vpop.f32.mrf.mxu0
        %v2860 = vadd.f32 %v2703, %v2859
        %v2861 = vpop.f32.mrf.mxu0
        %v2862 = vpop.f32.mrf.mxu0
        %v2863 = vadd.f32 %v2703, %v2862
        %v2864 = vpop.f32.mrf.mxu0
        %2865 = vmatprep.mubr.bf16.mxu0 %v2661
        %2866 = vmatmul.mubr.bf16.gmra.mxu0 %v2660
        %v2867 = vpop.f32.mrf.mxu0
        %v2868 = vadd.f32 %v2703, %v2867
        %v2869 = vpop.f32.mrf.mxu0
        %v2870 = vpop.f32.mrf.mxu0
        %v2871 = vadd.f32 %v2703, %v2870
        %v2872 = vpop.f32.mrf.mxu0
        %2873 = vmatprep.mubr.bf16.mxu0 %v2663
        %2874 = vmatmul.mubr.bf16.gmra.mxu0 %v2662
        %v2875 = vpop.f32.mrf.mxu0
        %v2876 = vadd.f32 %v2703, %v2875
        %v2877 = vpop.f32.mrf.mxu0
        %v2878 = vpop.f32.mrf.mxu0
        %v2879 = vadd.f32 %v2703, %v2878
        %v2880 = vpop.f32.mrf.mxu0
        %2881 = vmatprep.mubr.bf16.mxu0 %v2665
        %2882 = vmatmul.mubr.bf16.gmra.mxu0 %v2664
        %v2883 = vpop.f32.mrf.mxu0
        %v2884 = vadd.f32 %v2703, %v2883
        %v2885 = vpop.f32.mrf.mxu0
        %v2886 = vpop.f32.mrf.mxu0
        %v2887 = vadd.f32 %v2703, %v2886
        %v2888 = vpop.f32.mrf.mxu0
        %2889 = vdwg.mxu0
        %2890 = vst [vmem:[%s358] sm:$0xff] %v2836
        %2891 = vst [vmem:[%s358 + $0x8] sm:$0xff] %v2839
        %2892 = vst [vmem:[%s358 + $0x10] sm:$0xff] %v2844
        %2893 = vst [vmem:[%s358 + $0x18] sm:$0xff] %v2847
        %2894 = vst [vmem:[%s358 + $0x20] sm:$0xff] %v2852
        %2895 = vst [vmem:[%s358 + $0x28] sm:$0xff] %v2855
        %2896 = vst [vmem:[%s358 + $0x30] sm:$0xff] %v2860
        %2897 = vst [vmem:[%s358 + $0x38] sm:$0xff] %v2863
        %2898 = vst [vmem:[%s358 + $0x40] sm:$0xff] %v2868
        %2899 = vst [vmem:[%s358 + $0x48] sm:$0xff] %v2871
        %2900 = vst [vmem:[%s358 + $0x50] sm:$0xff] %v2876
        %2901 = vst [vmem:[%s358 + $0x58] sm:$0xff] %v2879
        %2902 = vst [vmem:[%s358 + $0x60] sm:$0xff] %v2884
        %2903 = vst [vmem:[%s358 + $0x68] sm:$0xff] %v2887
        %s2904 = sand.u32 %s186, 1
        %s2905 = scalar_lea.sflag [#allocation4], %s2904
        %s2906 = sand.u32 %s186, 1
        %s2907 = smul.addr %s2906, 112
        %s2908 = scalar_lea.vmem [#allocation11], %s2907
        // Predicated region
        $region69: #{tpu_custom_call.1} parent=47 // pred_check
          %p2909 = pneg %p196
        $region70: #{tpu_custom_call.1} parent=47 // pred_check_branch
          %2911 = sbr.rel (%p2909) target = $region72
        $region71: #{tpu_custom_call.1} parent=47 // pred_region
          %s2912 = smul.u32 14, %s26
          %s2913 = ssub.s32 25, %s2912
          %p2914 = scmp.lt.s32.totalorder %s2913, 14
          %s2915 = scalar_select %p2914, %s2913, 14
          %s2916 = smul.u32 128, %s2915
          %s2918 = ssub.s32 1792, %s2916
          %2919 = vsyncadd %s2905, %s2918
          %p2920 = scmp.ne.s32.totalorder 0, %s2916
          %s2921 = smul.addr %s2912, 128
          %s2922 = scalar_lea.hbm %s7, %s2921
          %s2923 = smul.u32 8, %s2915
          %s2924 = sshll.u32 %s2908, 4
          %s2925 = int_to_ptr.vmem [resolvable:$true] %s2924
          %s2926 = sshll.u32 %s2923, 4
          %2930 = dma.vmem_to_hbm [thread:$0]  (%p2920), %s2925, %s2926, %s2922, %s2905, 128, 128, 8
        $region72: #{tpu_custom_call.1} parent=47 // pred_fallthru
          _
      $region48: #{tpu_custom_call.1} parent=5 // pred_fallthru
        _
      %p2931 = scmp.le.s32.totalorder 2, %s21
      // Predicated region
      $region73: #{tpu_custom_call.1} parent=5 // pred_check
        %p2932 = pneg %p2931
      $region74: #{tpu_custom_call.1} parent=5 // pred_check_branch
        %2934 = sbr.rel (%p2932) target = $region76
      $region75: #{tpu_custom_call.1} parent=5 // pred_region
        %s2935 = ssub.s32 %s21, 2
        // Predicated region
        $region77: #{tpu_custom_call.1} parent=75 // pred_check
          %p2936 = pneg %p202
        $region78: #{tpu_custom_call.1} parent=75 // pred_check_branch
          %2938 = sbr.rel (%p2936) target = $region80
        $region79: #{tpu_custom_call.1} parent=75 // pred_region
          %s2939 = sand.u32 %s187, 1
          %s2940 = scalar_lea.sflag [#allocation4], %s2939
          %s2941 = sand.u32 %s187, 1
          %s2942 = smul.addr %s2941, 112
          %s2943 = scalar_lea.vmem [#allocation11], %s2942
          %2944 = dma.done %s2940, 1792
        $region80: #{tpu_custom_call.1} parent=75 // pred_fallthru
          _
      $region76: #{tpu_custom_call.1} parent=5 // pred_fallthru
        _
    $region6: #{tpu_custom_call.1} parent=1 // loop_footer
      %s25 = sadd.s32 1, %s21
    $region7: #{tpu_custom_call.1} parent=1 // loop_footer_branch
      %20 = sbr.rel target = $region3
    $region8: #{tpu_custom_call.1} parent=1 // loop_exit
      _
    %2945 = vsyncpa [#allocation3], 1
    %s2946 = scalar_lea.sflag [#allocation3], 1
    %2947 = vsyncpa %s2946, 1
    %2948 = vsyncpa [#allocation6], 1
    %2949 = vsyncpa [#allocation9], 1
    %2950 = vsyncpa [#allocation4], 1
    %s2951 = scalar_lea.sflag [#allocation4], 1
    %2952 = vsyncpa %s2951, 1

</llo_original>
